<compile_context>
chip_gen: v7x
topology: tpu7x:2x2x1
jax: 0.10.0
libtpu: 0.0.40
codegen_flags: <defaults>
</compile_context>

<pallas_src>
import math
from functools import partial

import jax
import jax.numpy as jnp
from jax.experimental import pallas as pl
from jax.experimental.pallas import tpu as pltpu

_NEG_INF = -1e30          # finite "-inf": fully masked rows stay finite (mean of V)
_LANE = 128


def _chip_generation():
    try:
        kind = jax.devices()[0].device_kind.lower()
    except Exception:
        kind = ""
    if "v5" in kind:
        return "v5e"
    if "v7" in kind:
        return "v7x"
    if "v6" in kind:
        return "v6e"
    return "other"


def _rotate_half(t, half):
    # concat([t2, t1]); the -/+ sign of rotate-half is folded into the sin table.
    return jnp.concatenate([t[:, half:], t[:, :half]], axis=-1)


def _qkv_rope_kernel(x_ref, cos_ref, sin_ref, w_ref, b_ref,
                     q_ref, k_ref, v_ref, *, d, half):
    x = x_ref[0]                       # (tq, D) bf16
    cos = cos_ref[...]                 # (tq, D) f32
    sin = sin_ref[...]                 # (tq, D) f32 (sign-folded)

    # Single fused projection: (tq, D) @ (D, 3D) with f32 accumulation on the MXU.
    qkv = jnp.dot(x, w_ref[...], preferred_element_type=jnp.float32) + b_ref[...]
    q = qkv[:, :d]                     # 1/sqrt(d_k) already folded into Wq/bq
    k = qkv[:, d:2 * d]
    v = qkv[:, 2 * d:]

    def rope(t):
        return t * cos + _rotate_half(t, half) * sin

    q_ref[0] = rope(q).astype(q_ref.dtype)
    k_ref[0] = rope(k).astype(k_ref.dtype)
    v_ref[0] = v.astype(v_ref.dtype)


def _flash_attn_kernel(*refs, causal, tq, tk, exp_dtype):
    if causal:
        q_ref, k_ref, v_ref, wo_ref, bo_ref, o_ref, m_scr, l_scr, acc_scr = refs
        mask_ref = None
    else:
        (mask_ref, q_ref, k_ref, v_ref, wo_ref, bo_ref,
         o_ref, m_scr, l_scr, acc_scr) = refs

    qi = pl.program_id(1)
    ki = pl.program_id(2)

    @pl.when(ki == 0)
    def _():
        m_scr[...] = jnp.full(m_scr.shape, _NEG_INF, dtype=m_scr.dtype)
        l_scr[...] = jnp.zeros(l_scr.shape, dtype=l_scr.dtype)
        acc_scr[...] = jnp.zeros(acc_scr.shape, dtype=acc_scr.dtype)

    def compute():
        q = q_ref[0]                   # (tq, D) bf16  (already scaled by 1/sqrt(d_k))
        k = k_ref[0]                   # (tk, D) bf16
        v = v_ref[0]                   # (tk, D) bf16

        # q @ k^T by contracting last dims (no explicit transpose).
        s = jax.lax.dot_general(q, k, (((1,), (1,)), ((), ())),
                                preferred_element_type=jnp.float32)   # (tq, tk) f32

        if causal:
            row = qi * tq + jax.lax.broadcasted_iota(jnp.int32, (tq, tk), 0)
            col = ki * tk + jax.lax.broadcasted_iota(jnp.int32, (tq, tk), 1)
            s = jnp.where(row >= col, s, _NEG_INF)
        else:
            s = jnp.where(mask_ref[0] != 0, s, _NEG_INF)

        # Online-softmax update (lane-dense (tq, 128) stats, lanes replicated).
        m_prev = m_scr[...]
        m_new = jnp.maximum(m_prev, jnp.max(s, axis=-1, keepdims=True))
        alpha = jnp.exp(m_prev - m_new)
        p = jnp.exp((s - m_new[:, :1]).astype(exp_dtype))             # bf16 EUP on v6e/v7x
        l_scr[...] = alpha * l_scr[...] + jnp.sum(
            p.astype(jnp.float32), axis=-1, keepdims=True)
        acc_scr[...] = alpha[:, :1] * acc_scr[...] + jnp.dot(
            p.astype(v.dtype), v, preferred_element_type=jnp.float32)
        m_scr[...] = m_new

    if causal:
        # Skip kv tiles that are entirely above the causal diagonal.
        pl.when(ki * tk < (qi + 1) * tq)(compute)
    else:
        compute()

    # Finalize: normalize and apply the fused output projection.
    @pl.when(ki == pl.num_programs(2) - 1)
    def _():
        inv_l = 1.0 / l_scr[...]
        ctx = acc_scr[...] * inv_l[:, :1]
        out = jnp.dot(ctx.astype(wo_ref.dtype), wo_ref[...],
                      preferred_element_type=jnp.float32) + bo_ref[...]
        o_ref[0] = out.astype(o_ref.dtype)


def attention_forward(x, mask, params, *, rope_base=10000.0, causal=False,
                      tq=None, tk=None, mxu_dtype=jnp.bfloat16):
    """x: (B, T, D) f32; mask: (B, T, T), 0 = masked out (ignored if causal=True).
    Returns (B, T, D) f32."""
    B, T, D = x.shape
    half = D // 2

    gen = _chip_generation()
    if tq is None:
        tq = 256
    if tk is None:
        tk = 128 if gen == "v5e" else 256   # v5e: native 128-wide MXU; v6e/v7x: 256
    tq = min(tq, T)
    tk = min(tk, T)
    # TODO(synk): ragged / non-tile-multiple sequence lengths are not supported.
    assert T % tq == 0 and T % tk == 0, "T must be divisible by the tile sizes"

    exp_dtype = jnp.bfloat16 if gen in ("v6e", "v7x") else jnp.float32
    vmem_limit = (32 if gen == "v7x" else 64) * 1024 * 1024

    # Rotary tables (plain-JAX glue).  rotate-half sign folded into the sin table.
    inv_freq = 1.0 / (rope_base ** (jnp.arange(0, half, dtype=jnp.float32) * 2.0 / D))
    ang = jnp.arange(T, dtype=jnp.float32)[:, None] * inv_freq[None, :]       # (T, D/2)
    cos = jnp.concatenate([jnp.cos(ang), jnp.cos(ang)], axis=-1)              # (T, D)
    sin_signed = jnp.concatenate([-jnp.sin(ang), jnp.sin(ang)], axis=-1)      # (T, D)

    wq_t, bq, wk_t, bk, wv_t, bv, wo_t, bo = params
    inv_std = 1.0 / math.sqrt(D)
    # Fuse Wq|Wk|Wv into one (D, 3D) weight; fold 1/sqrt(d_k) into the q part.
    w_qkv = jnp.concatenate([wq_t * inv_std, wk_t, wv_t], axis=1).astype(mxu_dtype)
    b_qkv = jnp.concatenate([bq * inv_std, bk, bv], axis=1).astype(jnp.float32)
    wo_c = wo_t.astype(mxu_dtype)
    bo_c = bo.astype(jnp.float32)
    x_c = x.astype(mxu_dtype)

    # Grid-constant operands: whole array resident in VMEM, single copy.
    resident = pl.BlockSpec(memory_space=pltpu.MemorySpace.VMEM)

    # ---- kernel 1: fused qkv projection + rotary embedding -----------------
    # Grid (T//tq, B): batch innermost, so cos/sin block indices are constant
    # across b and Pallas does not re-DMA them per batch.
    qkv_shape = jax.ShapeDtypeStruct((B, T, D), mxu_dtype)
    q, k, v = pl.pallas_call(
        partial(_qkv_rope_kernel, d=D, half=half),
        out_shape=(qkv_shape, qkv_shape, qkv_shape),
        grid_spec=pltpu.PrefetchScalarGridSpec(
            num_scalar_prefetch=0,
            grid=(T // tq, B),
            in_specs=[
                pl.BlockSpec((1, tq, D), lambda r, b: (b, r, 0)),   # x
                pl.BlockSpec((tq, D), lambda r, b: (r, 0)),         # cos
                pl.BlockSpec((tq, D), lambda r, b: (r, 0)),         # sin (signed)
                resident, resident,                                 # W_qkv, b_qkv
            ],
            out_specs=tuple(pl.BlockSpec((1, tq, D), lambda r, b: (b, r, 0))
                            for _ in range(3)),
        ),
        compiler_params=pltpu.CompilerParams(
            dimension_semantics=("parallel", "parallel"),
            vmem_limit_bytes=vmem_limit),
    )(x_c, cos, sin_signed, w_qkv, b_qkv)

    # ---- kernel 2: flash attention (online softmax) + fused out-projection --
    n_q = T // tq
    n_k = T // tk

    flash_args = []
    flash_in_specs = []
    if causal:
        # Clamp the kv block index so skipped (above-diagonal) steps keep the
        # previous block index and issue no new DMA.
        def kv_map(b, i, j):
            return (b, jnp.minimum(j, (i * tq + tq - 1) // tk), 0)
    else:
        assert mask is not None, "mask is required when causal=False"
        mask_i8 = mask if mask.dtype == jnp.int8 else (mask != 0).astype(jnp.int8)
        flash_args.append(mask_i8)
        flash_in_specs.append(pl.BlockSpec((1, tq, tk), lambda b, i, j: (b, i, j)))

        def kv_map(b, i, j):
            return (b, j, 0)

    flash_in_specs += [
        pl.BlockSpec((1, tq, D), lambda b, i, j: (b, i, 0)),        # q (resident over j)
        pl.BlockSpec((1, tk, D), kv_map),                           # k
        pl.BlockSpec((1, tk, D), kv_map),                           # v
        resident, resident,                                         # Wo, bo
    ]

    # Note (v7x megacore): both "parallel" axes (B, T//tq) are sharded across the
    # two TensorCores; keep B * (T // tq) even for load balance.
    return pl.pallas_call(
        partial(_flash_attn_kernel, causal=causal, tq=tq, tk=tk, exp_dtype=exp_dtype),
        out_shape=jax.ShapeDtypeStruct((B, T, D), jnp.float32),
        grid_spec=pltpu.PrefetchScalarGridSpec(
            num_scalar_prefetch=0,
            grid=(B, n_q, n_k),
            in_specs=flash_in_specs,
            out_specs=pl.BlockSpec((1, tq, D), lambda b, i, j: (b, i, 0)),
            scratch_shapes=[pltpu.VMEM((tq, _LANE), jnp.float32),   # running row max
                            pltpu.VMEM((tq, _LANE), jnp.float32),   # running denominator
                            pltpu.VMEM((tq, D), jnp.float32)],      # running context acc
        ),
        compiler_params=pltpu.CompilerParams(
            dimension_semantics=("parallel", "parallel", "arbitrary"),
            vmem_limit_bytes=vmem_limit),
    )(*flash_args, q, k, v, wo_c, bo_c)


def init_params(key, d_k):
    """nn.Linear default init: U(-1/sqrt(d_k), 1/sqrt(d_k)); weights stored as W^T."""
    bound = 1.0 / math.sqrt(d_k)
    keys = jax.random.split(key, 8)

    def lin(kw, kb):
        w = jax.random.uniform(kw, (d_k, d_k), jnp.float32, -bound, bound)  # (out, in)
        b = jax.random.uniform(kb, (1, d_k), jnp.float32, -bound, bound)
        return w.T, b

    wq_t, bq = lin(keys[0], keys[1])
    wk_t, bk = lin(keys[2], keys[3])
    wv_t, bv = lin(keys[4], keys[5])
    wo_t, bo = lin(keys[6], keys[7])
    return (wq_t, bq, wk_t, bk, wv_t, bv, wo_t, bo)


def reference_forward(x, mask, params, rope_base=10000.0):
    """Plain-JAX f32 reference matching the PyTorch module (eval mode, cache=None)."""
    wq_t, bq, wk_t, bk, wv_t, bv, wo_t, bo = params
    _, T, D = x.shape
    half = D // 2
    inv_freq = 1.0 / (rope_base ** (jnp.arange(0, half, dtype=jnp.float32) * 2.0 / D))
    ang = jnp.arange(T, dtype=jnp.float32)[:, None] * inv_freq[None, :]
    cos = jnp.concatenate([jnp.cos(ang), jnp.cos(ang)], axis=-1)
    sin = jnp.concatenate([jnp.sin(ang), jnp.sin(ang)], axis=-1)

    def rope(t):
        t1, t2 = t[..., :half], t[..., half:]
        return t * cos + jnp.concatenate([-t2, t1], axis=-1) * sin

    q = rope(x @ wq_t + bq)
    k = rope(x @ wk_t + bk)
    v = x @ wv_t + bv
    s = jnp.einsum("bqd,bkd->bqk", q, k) / math.sqrt(D)
    s = jnp.where(mask == 0, -jnp.inf, s)
    p = jax.nn.softmax(s, axis=-1)
    ctx = jnp.einsum("bqk,bkd->bqd", p, v)
    return ctx @ wo_t + bo


if __name__ == "__main__":
    # Lane-dense small shapes (D multiple of 128) that still exercise multi-tile
    # flash attention on all supported tile configurations.
    B, T, D = 2, 256, 128

    key = jax.random.PRNGKey(0)
    k_x, k_p = jax.random.split(key)
    x = jax.random.normal(k_x, (B, T, D), jnp.float32)
    params = init_params(k_p, D)

    # Causal mask stored directly as int8 (1 = keep, 0 = masked), per-batch broadcast.
    mask = jnp.broadcast_to(jnp.tril(jnp.ones((T, T), jnp.int8)), (B, T, T))

    # Path 1: mask generated in-kernel + above-diagonal kv tiles skipped entirely.
    out_causal = attention_forward(x, None, params, causal=True)
    # Path 2: general explicit mask, streamed as int8 tiles.
    out_masked = attention_forward(x, mask, params, causal=False)
    jax.block_until_ready((out_causal, out_masked))

    ref = reference_forward(x, mask, params)

    def rel_err(a, b):
        return float(jnp.linalg.norm((a - b).astype(jnp.float32))
                     / (jnp.linalg.norm(b.astype(jnp.float32)) + 1e-12))

    for out in (out_causal, out_masked):
        assert out.shape == (B, T, D)
        assert bool(jnp.all(jnp.isfinite(out)))
    assert rel_err(out_causal, ref) < 5e-2, rel_err(out_causal, ref)   # bf16 MXU tolerance
    assert rel_err(out_masked, ref) < 5e-2, rel_err(out_masked, ref)
    assert rel_err(out_causal, out_masked) < 1e-3

    print("KERNEL_OK")
</pallas_src>

<mosaic_0001>
module attributes {stable_mosaic.version = 11 : i64} {
  func.func @_qkv_rope_kernel(%arg0: i32, %arg1: i32, %arg2: memref<1x256x128xbf16, #tpu.memory_space<vmem>>, %arg3: memref<256x128xf32, #tpu.memory_space<vmem>>, %arg4: memref<256x128xf32, #tpu.memory_space<vmem>>, %arg5: memref<128x384xbf16, #tpu.memory_space<vmem>>, %arg6: memref<1x384xf32, #tpu.memory_space<vmem>>, %arg7: memref<1x256x128xbf16, #tpu.memory_space<vmem>>, %arg8: memref<1x256x128xbf16, #tpu.memory_space<vmem>>, %arg9: memref<1x256x128xbf16, #tpu.memory_space<vmem>>) attributes {dimension_semantics = [#tpu.dimension_semantics<parallel>, #tpu.dimension_semantics<parallel>], iteration_bounds = array<i64: 1, 2>, scalar_prefetch = 0 : i64, scratch_operands = 0 : i64, tpu.core_type = #tpu.core_type<tc>, window_params = [{transform_indices = @transform_0, window_bounds = array<i64: 1, 256, 128>}, {transform_indices = @transform_1, window_bounds = array<i64: 256, 128>}, {transform_indices = @transform_2, window_bounds = array<i64: 256, 128>}, {pipeline_mode = #tpu.pipeline_mode<synchronous>, transform_indices = @transform_3, window_bounds = array<i64: 128, 384>}, {pipeline_mode = #tpu.pipeline_mode<synchronous>, transform_indices = @transform_4, window_bounds = array<i64: 1, 384>}, {transform_indices = @transform_5, window_bounds = array<i64: 1, 256, 128>}, {transform_indices = @transform_6, window_bounds = array<i64: 1, 256, 128>}, {transform_indices = @transform_7, window_bounds = array<i64: 1, 256, 128>}]} {
    %c0 = arith.constant 0 : index
    %c0_0 = arith.constant 0 : index
    %c0_1 = arith.constant 0 : index
    %0 = vector.load %arg2[%c0, %c0_0, %c0_1] : memref<1x256x128xbf16, #tpu.memory_space<vmem>>, vector<1x256x128xbf16>
    %1 = vector.shape_cast %0 : vector<1x256x128xbf16> to vector<256x128xbf16>
    %c0_2 = arith.constant 0 : index
    %c0_3 = arith.constant 0 : index
    %2 = vector.load %arg3[%c0_2, %c0_3] : memref<256x128xf32, #tpu.memory_space<vmem>>, vector<256x128xf32>
    %c0_4 = arith.constant 0 : index
    %c0_5 = arith.constant 0 : index
    %3 = vector.load %arg4[%c0_4, %c0_5] : memref<256x128xf32, #tpu.memory_space<vmem>>, vector<256x128xf32>
    %c0_6 = arith.constant 0 : index
    %c0_7 = arith.constant 0 : index
    %4 = vector.load %arg5[%c0_6, %c0_7] : memref<128x384xbf16, #tpu.memory_space<vmem>>, vector<128x384xbf16>
    %cst = arith.constant dense<0.000000e+00> : vector<256x384xf32>
    %5 = tpu.matmul %1, %4, %cst {dimension_numbers = #tpu.dot_dimension_numbers<[1], [0], [0], [1], [0, 0, 1, 1], [], []>} : vector<256x128xbf16>, vector<128x384xbf16>, vector<256x384xf32> -> vector<256x384xf32>
    %c0_8 = arith.constant 0 : index
    %c0_9 = arith.constant 0 : index
    %6 = vector.load %arg6[%c0_8, %c0_9] : memref<1x384xf32, #tpu.memory_space<vmem>>, vector<1x384xf32>
    %7 = vector.broadcast %6 : vector<1x384xf32> to vector<256x384xf32>
    %8 = arith.addf %5, %7 : vector<256x384xf32>
    %9 = vector.extract_strided_slice %8 {offsets = [0, 0], sizes = [256, 128], strides = [1, 1]} : vector<256x384xf32> to vector<256x128xf32>
    %10 = vector.extract_strided_slice %8 {offsets = [0, 128], sizes = [256, 128], strides = [1, 1]} : vector<256x384xf32> to vector<256x128xf32>
    %11 = vector.extract_strided_slice %8 {offsets = [0, 256], sizes = [256, 128], strides = [1, 1]} : vector<256x384xf32> to vector<256x128xf32>
    %12 = arith.mulf %9, %2 : vector<256x128xf32>
    %13 = vector.extract_strided_slice %9 {offsets = [0, 64], sizes = [256, 64], strides = [1, 1]} : vector<256x128xf32> to vector<256x64xf32>
    %14 = vector.extract_strided_slice %9 {offsets = [0, 0], sizes = [256, 64], strides = [1, 1]} : vector<256x128xf32> to vector<256x64xf32>
    %15 = tpu.concatenate %13, %14 in 1 : vector<256x64xf32>, vector<256x64xf32> -> vector<256x128xf32>
    %16 = arith.mulf %15, %3 : vector<256x128xf32>
    %17 = arith.addf %12, %16 : vector<256x128xf32>
    %18 = arith.truncf %17 : vector<256x128xf32> to vector<256x128xbf16>
    %c0_10 = arith.constant 0 : index
    %c0_11 = arith.constant 0 : index
    %c0_12 = arith.constant 0 : index
    %19 = vector.load %arg7[%c0_10, %c0_11, %c0_12] : memref<1x256x128xbf16, #tpu.memory_space<vmem>>, vector<1x256x128xbf16>
    %20 = vector.shape_cast %19 : vector<1x256x128xbf16> to vector<256x128xbf16>
    %21 = vector.shape_cast %18 : vector<256x128xbf16> to vector<1x256x128xbf16>
    tpu.vector_store %arg7[%c0_10, %c0_11, %c0_12], %21 {strides = array<i32>} : memref<1x256x128xbf16, #tpu.memory_space<vmem>>, vector<1x256x128xbf16>,
    %22 = arith.mulf %10, %2 : vector<256x128xf32>
    %23 = vector.extract_strided_slice %10 {offsets = [0, 64], sizes = [256, 64], strides = [1, 1]} : vector<256x128xf32> to vector<256x64xf32>
    %24 = vector.extract_strided_slice %10 {offsets = [0, 0], sizes = [256, 64], strides = [1, 1]} : vector<256x128xf32> to vector<256x64xf32>
    %25 = tpu.concatenate %23, %24 in 1 : vector<256x64xf32>, vector<256x64xf32> -> vector<256x128xf32>
    %26 = arith.mulf %25, %3 : vector<256x128xf32>
    %27 = arith.addf %22, %26 : vector<256x128xf32>
    %28 = arith.truncf %27 : vector<256x128xf32> to vector<256x128xbf16>
    %c0_13 = arith.constant 0 : index
    %c0_14 = arith.constant 0 : index
    %c0_15 = arith.constant 0 : index
    %29 = vector.load %arg8[%c0_13, %c0_14, %c0_15] : memref<1x256x128xbf16, #tpu.memory_space<vmem>>, vector<1x256x128xbf16>
    %30 = vector.shape_cast %29 : vector<1x256x128xbf16> to vector<256x128xbf16>
    %31 = vector.shape_cast %28 : vector<256x128xbf16> to vector<1x256x128xbf16>
    tpu.vector_store %arg8[%c0_13, %c0_14, %c0_15], %31 {strides = array<i32>} : memref<1x256x128xbf16, #tpu.memory_space<vmem>>, vector<1x256x128xbf16>,
    %32 = arith.truncf %11 : vector<256x128xf32> to vector<256x128xbf16>
    %c0_16 = arith.constant 0 : index
    %c0_17 = arith.constant 0 : index
    %c0_18 = arith.constant 0 : index
    %33 = vector.load %arg9[%c0_16, %c0_17, %c0_18] : memref<1x256x128xbf16, #tpu.memory_space<vmem>>, vector<1x256x128xbf16>
    %34 = vector.shape_cast %33 : vector<1x256x128xbf16> to vector<256x128xbf16>
    %35 = vector.shape_cast %32 : vector<256x128xbf16> to vector<1x256x128xbf16>
    tpu.vector_store %arg9[%c0_16, %c0_17, %c0_18], %35 {strides = array<i32>} : memref<1x256x128xbf16, #tpu.memory_space<vmem>>, vector<1x256x128xbf16>,
    return
  }
  func.func @transform_0(%arg0: i32, %arg1: i32) -> (i32, i32, i32) {
    %c0_i32 = arith.constant 0 : i32
    %c0_i32_0 = arith.constant 0 : i32
    return %arg1, %arg0, %c0_i32 : i32, i32, i32
  }
  func.func @transform_1(%arg0: i32, %arg1: i32) -> (i32, i32) {
    %c0_i32 = arith.constant 0 : i32
    %c0_i32_0 = arith.constant 0 : i32
    return %arg0, %c0_i32 : i32, i32
  }
  func.func @transform_2(%arg0: i32, %arg1: i32) -> (i32, i32) {
    %c0_i32 = arith.constant 0 : i32
    %c0_i32_0 = arith.constant 0 : i32
    return %arg0, %c0_i32 : i32, i32
  }
  func.func @transform_3(%arg0: i32, %arg1: i32) -> (i32, i32) {
    %c0_i32 = arith.constant 0 : i32
    %c0_i32_0 = arith.constant 0 : i32
    %c0_i32_1 = arith.constant 0 : i32
    return %c0_i32, %c0_i32_0 : i32, i32
  }
  func.func @transform_4(%arg0: i32, %arg1: i32) -> (i32, i32) {
    %c0_i32 = arith.constant 0 : i32
    %c0_i32_0 = arith.constant 0 : i32
    %c0_i32_1 = arith.constant 0 : i32
    return %c0_i32, %c0_i32_0 : i32, i32
  }
  func.func @transform_5(%arg0: i32, %arg1: i32) -> (i32, i32, i32) {
    %c0_i32 = arith.constant 0 : i32
    %c0_i32_0 = arith.constant 0 : i32
    return %arg1, %arg0, %c0_i32 : i32, i32, i32
  }
  func.func @transform_6(%arg0: i32, %arg1: i32) -> (i32, i32, i32) {
    %c0_i32 = arith.constant 0 : i32
    %c0_i32_0 = arith.constant 0 : i32
    return %arg1, %arg0, %c0_i32 : i32, i32, i32
  }
  func.func @transform_7(%arg0: i32, %arg1: i32) -> (i32, i32, i32) {
    %c0_i32 = arith.constant 0 : i32
    %c0_i32_0 = arith.constant 0 : i32
    return %arg1, %arg0, %c0_i32 : i32, i32, i32
  }
}

</mosaic_0001>

<llo_original>
// kernel: tpu_custom_call.1
$region0: #{tpu_custom_call.1}
  #allocation0 [shape = 'u32[]', space=smem, size = 0x4, offset = 0x4, fixed_abs, tag = 'smem constant byte address 0x4 - core index']
  #allocation1 [shape = 'u32[144,128]{1,0:T(1,128)}', space=vmem, size = 0x12000, scoped, tag = 'internal scratch']
  %s0 = inlined_call_operand.hbm [shape: bf16[2,256,128], index: 0, kind: input, shape index: {}]
  %s1 = inlined_call_operand.hbm [shape: f32[256,128], index: 1, kind: input, shape index: {}]
  %s2 = inlined_call_operand.hbm [shape: f32[256,128], index: 2, kind: input, shape index: {}]
  %s3 = inlined_call_operand.hbm [shape: bf16[128,384], index: 3, kind: input, shape index: {}]
  %s4 = inlined_call_operand.hbm [shape: f32[1,384], index: 4, kind: input, shape index: {}]
  %s5 = inlined_call_operand.hbm [shape: bf16[2,256,128], index: 5, kind: output, shape index: {0}]
  %s6 = inlined_call_operand.hbm [shape: bf16[2,256,128], index: 6, kind: output, shape index: {1}]
  %s7 = inlined_call_operand.hbm [shape: bf16[2,256,128], index: 7, kind: output, shape index: {2}]
  %8 = xla_tuple %s5, %s6, %s7
  %s9 = sld [smem:[#allocation0]]
  $region89: #{tpu_custom_call.1} parent=0
    _
  %s11 = ssub.s32 1, %s9
  %s12 = scalar_select 0, %s11, %s9
  $region1: #{tpu_custom_call.1} parent=0
    #allocation2 [shape = 'u8[131072]{0}', space=vmem, size = 0x20000, scoped, tag = 'input window, operand 0']
    #allocation3 [shape = 's32[2]{0}', space=sflag, size = 0x8, scoped, tag = 'scoped memory for tpu_custom_call.1']
    #allocation4 [shape = 's32[2]{0}', space=sflag, size = 0x8, scoped, tag = 'scoped memory for tpu_custom_call.1']
    #allocation5 [shape = 'u8[131072]{0}', space=vmem, size = 0x20000, scoped, tag = 'input window, operand 1, single buffered']
    #allocation6 [shape = 's32[1]{0}', space=sflag, size = 0x4, scoped, tag = 'scoped memory for tpu_custom_call.1']
    #allocation7 [shape = 'u8[131072]{0}', space=vmem, size = 0x20000, scoped, tag = 'input window, operand 2, single buffered']
    #allocation8 [shape = 'u8[98304]{0}', space=vmem, size = 0x18000, scoped, tag = 'input window, operand 3, single buffered']
    #allocation9 [shape = 's32[1]{0}', space=sflag, size = 0x4, scoped, tag = 'scoped memory for tpu_custom_call.1']
    #allocation10 [shape = 'u8[1536]{0}', space=vmem, size = 0x800, scoped, tag = 'input window, operand 4, single buffered']
    #allocation11 [shape = 'u8[131072]{0}', space=vmem, size = 0x20000, scoped, tag = 'output window, operand 0']
    #allocation12 [shape = 'u8[131072]{0}', space=vmem, size = 0x20000, scoped, tag = 'output window, operand 1']
    #allocation13 [shape = 's32[2]{0}', space=sflag, size = 0x8, scoped, tag = 'scoped memory for tpu_custom_call.1']
    #allocation14 [shape = 'u8[131072]{0}', space=vmem, size = 0x20000, scoped, tag = 'output window, operand 2']
    %13 = vsyncpa [#allocation3], 0
    %s14 = scalar_lea.sflag [#allocation3], 1
    %15 = vsyncpa %s14, 0
    %16 = vsyncpa [#allocation6], 0
    %17 = vsyncpa [#allocation9], 0
    %18 = vsyncpa [#allocation4], 0
    %s19 = scalar_lea.sflag [#allocation4], 1
    %20 = vsyncpa %s19, 0
    %21 = vsyncpa [#allocation13], 0
    %s22 = scalar_lea.sflag [#allocation13], 1
    %23 = vsyncpa %s22, 0
    loop: start=0, step=1, limit=4
    $region2: #{tpu_custom_call.1} parent=1 // loop_pre_header
      _
    $region3: #{tpu_custom_call.1} parent=1 // loop_header
      %s25 = sphi 0, %s29
      %p26 = scmp.ge.s32.totalorder %s25, 4
      %s32 = sphi 0, %s44
      %s33 = sphi 0, %s40
      %s34 = sphi 0, %s32
      %s35 = sphi 0, %s33
      %s36 = sphi 0, %s34
      %s37 = sphi 0, %s35
      %s49 = sphi 0, %s51
      %s52 = sphi 0, %s49
      %s53 = sphi 0, %s52
      %s69 = sphi 0, %s53
      %s75 = sphi 0, %s77
      %s78 = sphi 0, %s75
      %s79 = sphi 0, %s78
      %s95 = sphi 0, %s79
      %s101 = sphi 0, %s103
      %s104 = sphi 0, %s101
      %s105 = sphi 0, %s104
      %s121 = sphi 0, %s105
      %s125 = sphi 0, %s125
      %s127 = sphi 0, %s125
      %s128 = sphi 0, %s127
      %s142 = sphi 0, %s128
      %s146 = sphi 0, %s146
      %s148 = sphi 0, %s146
      %s149 = sphi 0, %s148
      %s163 = sphi 0, %s149
      %s171 = sphi 0, %s173
      %s174 = sphi 0, %s171
      %s175 = sphi 0, %s174
      %s191 = sphi 0, %s175
      %s199 = sphi 0, %s201
      %s202 = sphi 0, %s199
      %s203 = sphi 0, %s202
      %s219 = sphi 0, %s203
      %s227 = sphi 0, %s229
      %s230 = sphi 0, %s227
      %s231 = sphi 0, %s230
      %s247 = sphi 0, %s231
    $region4: #{tpu_custom_call.1} parent=1 // loop_header_branch
      %28 = sbr.rel (%p26) target = $region8
    $region5: #{tpu_custom_call.1} parent=1 // loop_body
      %s30 = ssub.s32 %s25, 1
      %s31 = ssub.s32 %s25, 2
      %s38 = sadd.s32 1, %s33
      %p39 = scmp.ge.s32.totalorder %s38, 2
      %s40 = scalar_select %p39, 0, %s38
      %s41 = sadd.s32 1, %s32
      %s42 = scalar_select %p39, %s41, %s32
      %p43 = scmp.ge.s32.totalorder %s42, 1
      %s44 = scalar_select %p43, 0, %s42
      %s45 = ssub.s32 %s33, %s40
      %s46 = ssub.s32 %s32, %s44
      %s47 = sor.u32 %s45, %s46
      %p48 = scmp.eq.s32.totalorder %s47, 0
      %s50 = sadd.s32 %s49, 1
      %s51 = scalar_select %p48, %s49, %s50
      %p54 = pneg %p48
      %p55 = scmp.eq.s32.totalorder %s25, 1
      %p56 = por %p54, %p55
      %p57 = scmp.ne.s32.totalorder %s49, %s52
      %p58 = scmp.eq.s32.totalorder %s25, 0
      %p59 = por %p57, %p58
      %p60 = scmp.ne.s32.totalorder %s49, %s52
      %p61 = scmp.eq.s32.totalorder %s30, 1
      %p62 = por %p60, %p61
      %p63 = scmp.ne.s32.totalorder %s52, %s53
      %p64 = scmp.eq.s32.totalorder %s30, 0
      %p65 = por %p63, %p64
      %p66 = scmp.ne.s32.totalorder %s52, %s53
      %p67 = scmp.eq.s32.totalorder %s31, 1
      %p68 = por %p66, %p67
      %p70 = scmp.ne.s32.totalorder %s53, %s69
      %p71 = scmp.eq.s32.totalorder %s31, 0
      %p72 = por %p70, %p71
      %s73 = ssub.s32 %s32, %s44
      %p74 = scmp.eq.s32.totalorder %s73, 0
      %s76 = sadd.s32 %s75, 1
      %s77 = scalar_select %p74, %s75, %s76
      %p80 = pneg %p74
      %p81 = scmp.eq.s32.totalorder %s25, 1
      %p82 = por %p80, %p81
      %p83 = scmp.ne.s32.totalorder %s75, %s78
      %p84 = scmp.eq.s32.totalorder %s25, 0
      %p85 = por %p83, %p84
      %p86 = scmp.ne.s32.totalorder %s75, %s78
      %p87 = scmp.eq.s32.totalorder %s30, 1
      %p88 = por %p86, %p87
      %p89 = scmp.ne.s32.totalorder %s78, %s79
      %p90 = scmp.eq.s32.totalorder %s30, 0
      %p91 = por %p89, %p90
      %p92 = scmp.ne.s32.totalorder %s78, %s79
      %p93 = scmp.eq.s32.totalorder %s31, 1
      %p94 = por %p92, %p93
      %p96 = scmp.ne.s32.totalorder %s79, %s95
      %p97 = scmp.eq.s32.totalorder %s31, 0
      %p98 = por %p96, %p97
      %s99 = ssub.s32 %s32, %s44
      %p100 = scmp.eq.s32.totalorder %s99, 0
      %s102 = sadd.s32 %s101, 1
      %s103 = scalar_select %p100, %s101, %s102
      %p106 = pneg %p100
      %p107 = scmp.eq.s32.totalorder %s25, 1
      %p108 = por %p106, %p107
      %p109 = scmp.ne.s32.totalorder %s101, %s104
      %p110 = scmp.eq.s32.totalorder %s25, 0
      %p111 = por %p109, %p110
      %p112 = scmp.ne.s32.totalorder %s101, %s104
      %p113 = scmp.eq.s32.totalorder %s30, 1
      %p114 = por %p112, %p113
      %p115 = scmp.ne.s32.totalorder %s104, %s105
      %p116 = scmp.eq.s32.totalorder %s30, 0
      %p117 = por %p115, %p116
      %p118 = scmp.ne.s32.totalorder %s104, %s105
      %p119 = scmp.eq.s32.totalorder %s31, 1
      %p120 = por %p118, %p119
      %p122 = scmp.ne.s32.totalorder %s105, %s121
      %p123 = scmp.eq.s32.totalorder %s31, 0
      %p124 = por %p122, %p123
      %s126 = sadd.s32 %s125, 1
      %p129 = scmp.eq.s32.totalorder %s25, 1
      %p130 = scmp.ne.s32.totalorder %s125, %s127
      %p131 = scmp.eq.s32.totalorder %s25, 0
      %p132 = por %p130, %p131
      %p133 = scmp.ne.s32.totalorder %s125, %s127
      %p134 = scmp.eq.s32.totalorder %s30, 1
      %p135 = por %p133, %p134
      %p136 = scmp.ne.s32.totalorder %s127, %s128
      %p137 = scmp.eq.s32.totalorder %s30, 0
      %p138 = por %p136, %p137
      %p139 = scmp.ne.s32.totalorder %s127, %s128
      %p140 = scmp.eq.s32.totalorder %s31, 1
      %p141 = por %p139, %p140
      %p143 = scmp.ne.s32.totalorder %s128, %s142
      %p144 = scmp.eq.s32.totalorder %s31, 0
      %p145 = por %p143, %p144
      %s147 = sadd.s32 %s146, 1
      %p150 = scmp.eq.s32.totalorder %s25, 1
      %p151 = scmp.ne.s32.totalorder %s146, %s148
      %p152 = scmp.eq.s32.totalorder %s25, 0
      %p153 = por %p151, %p152
      %p154 = scmp.ne.s32.totalorder %s146, %s148
      %p155 = scmp.eq.s32.totalorder %s30, 1
      %p156 = por %p154, %p155
      %p157 = scmp.ne.s32.totalorder %s148, %s149
      %p158 = scmp.eq.s32.totalorder %s30, 0
      %p159 = por %p157, %p158
      %p160 = scmp.ne.s32.totalorder %s148, %s149
      %p161 = scmp.eq.s32.totalorder %s31, 1
      %p162 = por %p160, %p161
      %p164 = scmp.ne.s32.totalorder %s149, %s163
      %p165 = scmp.eq.s32.totalorder %s31, 0
      %p166 = por %p164, %p165
      %s167 = ssub.s32 %s33, %s40
      %s168 = ssub.s32 %s32, %s44
      %s169 = sor.u32 %s167, %s168
      %p170 = scmp.eq.s32.totalorder %s169, 0
      %s172 = sadd.s32 %s171, 1
      %s173 = scalar_select %p170, %s171, %s172
      %p176 = pneg %p170
      %p177 = scmp.eq.s32.totalorder %s25, 1
      %p178 = por %p176, %p177
      %p179 = scmp.ne.s32.totalorder %s171, %s174
      %p180 = scmp.eq.s32.totalorder %s25, 0
      %p181 = por %p179, %p180
      %p182 = scmp.ne.s32.totalorder %s171, %s174
      %p183 = scmp.eq.s32.totalorder %s30, 1
      %p184 = por %p182, %p183
      %p185 = scmp.ne.s32.totalorder %s174, %s175
      %p186 = scmp.eq.s32.totalorder %s30, 0
      %p187 = por %p185, %p186
      %p188 = scmp.ne.s32.totalorder %s174, %s175
      %p189 = scmp.eq.s32.totalorder %s31, 1
      %p190 = por %p188, %p189
      %p192 = scmp.ne.s32.totalorder %s175, %s191
      %p193 = scmp.eq.s32.totalorder %s31, 0
      %p194 = por %p192, %p193
      %s195 = ssub.s32 %s33, %s40
      %s196 = ssub.s32 %s32, %s44
      %s197 = sor.u32 %s195, %s196
      %p198 = scmp.eq.s32.totalorder %s197, 0
      %s200 = sadd.s32 %s199, 1
      %s201 = scalar_select %p198, %s199, %s200
      %p204 = pneg %p198
      %p205 = scmp.eq.s32.totalorder %s25, 1
      %p206 = por %p204, %p205
      %p207 = scmp.ne.s32.totalorder %s199, %s202
      %p208 = scmp.eq.s32.totalorder %s25, 0
      %p209 = por %p207, %p208
      %p210 = scmp.ne.s32.totalorder %s199, %s202
      %p211 = scmp.eq.s32.totalorder %s30, 1
      %p212 = por %p210, %p211
      %p213 = scmp.ne.s32.totalorder %s202, %s203
      %p214 = scmp.eq.s32.totalorder %s30, 0
      %p215 = por %p213, %p214
      %p216 = scmp.ne.s32.totalorder %s202, %s203
      %p217 = scmp.eq.s32.totalorder %s31, 1
      %p218 = por %p216, %p217
      %p220 = scmp.ne.s32.totalorder %s203, %s219
      %p221 = scmp.eq.s32.totalorder %s31, 0
      %p222 = por %p220, %p221
      %s223 = ssub.s32 %s33, %s40
      %s224 = ssub.s32 %s32, %s44
      %s225 = sor.u32 %s223, %s224
      %p226 = scmp.eq.s32.totalorder %s225, 0
      %s228 = sadd.s32 %s227, 1
      %s229 = scalar_select %p226, %s227, %s228
      %p232 = pneg %p226
      %p233 = scmp.eq.s32.totalorder %s25, 1
      %p234 = por %p232, %p233
      %p235 = scmp.ne.s32.totalorder %s227, %s230
      %p236 = scmp.eq.s32.totalorder %s25, 0
      %p237 = por %p235, %p236
      %p238 = scmp.ne.s32.totalorder %s227, %s230
      %p239 = scmp.eq.s32.totalorder %s30, 1
      %p240 = por %p238, %p239
      %p241 = scmp.ne.s32.totalorder %s230, %s231
      %p242 = scmp.eq.s32.totalorder %s30, 0
      %p243 = por %p241, %p242
      %p244 = scmp.ne.s32.totalorder %s230, %s231
      %p245 = scmp.eq.s32.totalorder %s31, 1
      %p246 = por %p244, %p245
      %p248 = scmp.ne.s32.totalorder %s231, %s247
      %p249 = scmp.eq.s32.totalorder %s31, 0
      %p250 = por %p248, %p249
      %p251 = scmp.le.s32.totalorder 1, %s25
      %p252 = scmp.lt.s32.totalorder %s25, 3
      %p253 = pnand %p251, %p252
      %p254 = pneg %p253
      // Predicated region
      $region9: #{tpu_custom_call.1} parent=5 // pred_check
        _
      $region10: #{tpu_custom_call.1} parent=5 // pred_check_branch
        %256 = sbr.rel (%p253) target = $region12
      $region11: #{tpu_custom_call.1} parent=5 // pred_region
        %s257 = ssub.s32 %s25, 1
        // Predicated region
        $region13: #{tpu_custom_call.1} parent=11 // pred_check
          %p258 = pneg %p91
        $region14: #{tpu_custom_call.1} parent=11 // pred_check_branch
          %260 = sbr.rel (%p258) target = $region16
        $region15: #{tpu_custom_call.1} parent=11 // pred_region
          %s261 = smul.u32 32, %s34
          %s263 = ssub.s32 4096, 4096
          %264 = vsyncadd [#allocation6], %s263
          %s265 = smul.addr %s261, 128
          %s266 = scalar_lea.hbm %s1, %s265
          %s267 = sshll.u32 [#allocation5], 4
          %s268 = int_to_ptr.vmem [resolvable:$true] %s267
          %273 = dma.hbm_to_vmem [thread:$0]  %s266, 4096, %s268, [#allocation6], 128, 128, 8
        $region16: #{tpu_custom_call.1} parent=11 // pred_fallthru
          _
        // Predicated region
        $region17: #{tpu_custom_call.1} parent=11 // pred_check
          %p274 = pneg %p117
        $region18: #{tpu_custom_call.1} parent=11 // pred_check_branch
          %276 = sbr.rel (%p274) target = $region20
        $region19: #{tpu_custom_call.1} parent=11 // pred_region
          %s277 = smul.u32 32, %s34
          %s279 = ssub.s32 4096, 4096
          %280 = vsyncadd [#allocation6], %s279
          %s281 = smul.addr %s277, 128
          %s282 = scalar_lea.hbm %s2, %s281
          %s283 = sshll.u32 [#allocation7], 4
          %s284 = int_to_ptr.vmem [resolvable:$true] %s283
          %289 = dma.hbm_to_vmem [thread:$0]  %s282, 4096, %s284, [#allocation6], 128, 128, 8
        $region20: #{tpu_custom_call.1} parent=11 // pred_fallthru
          _
        // Predicated region
        $region21: #{tpu_custom_call.1} parent=11 // pred_check
          %p290 = pneg %p138
        $region22: #{tpu_custom_call.1} parent=11 // pred_check_branch
          %292 = sbr.rel (%p290) target = $region24
        $region23: #{tpu_custom_call.1} parent=11 // pred_region
          %s294 = ssub.s32 3072, 3072
          %295 = vsyncadd [#allocation9], %s294
          %s296 = sshll.u32 [#allocation8], 4
          %s297 = int_to_ptr.vmem [resolvable:$true] %s296
          %302 = dma.hbm_to_vmem [thread:$0]  %s3, 3072, %s297, [#allocation9], 192, 192, 12
        $region24: #{tpu_custom_call.1} parent=11 // pred_fallthru
          _
        // Predicated region
        $region25: #{tpu_custom_call.1} parent=11 // pred_check
          %p303 = pneg %p159
        $region26: #{tpu_custom_call.1} parent=11 // pred_check_branch
          %305 = sbr.rel (%p303) target = $region28
        $region27: #{tpu_custom_call.1} parent=11 // pred_region
          %s307 = ssub.s32 48, 48
          %308 = vsyncadd [#allocation9], %s307
          %s310 = sshll.u32 [#allocation10], 4
          %s311 = int_to_ptr.vmem [resolvable:$true] %s310
          %313 = dma.hbm_to_vmem [thread:$0]  %s4, 48, %s311, [#allocation9]
        $region28: #{tpu_custom_call.1} parent=11 // pred_fallthru
          _
      $region12: #{tpu_custom_call.1} parent=5 // pred_fallthru
        _
      %p314 = scmp.lt.s32.totalorder %s25, 2
      // Predicated region
      $region29: #{tpu_custom_call.1} parent=5 // pred_check
        %p315 = pneg %p314
      $region30: #{tpu_custom_call.1} parent=5 // pred_check_branch
        %317 = sbr.rel (%p315) target = $region32
      $region31: #{tpu_custom_call.1} parent=5 // pred_region
        // Predicated region
        $region33: #{tpu_custom_call.1} parent=31 // pred_check
          %p318 = pneg %p59
        $region34: #{tpu_custom_call.1} parent=31 // pred_check_branch
          %320 = sbr.rel (%p318) target = $region36
        $region35: #{tpu_custom_call.1} parent=31 // pred_region
          %s321 = sand.u32 %s49, 1
          %s322 = scalar_lea.sflag [#allocation3], %s321
          %s323 = sand.u32 %s49, 1
          %s324 = smul.addr %s323, 128
          %s325 = scalar_lea.vmem [#allocation2], %s324
          %s326 = smul.u32 32, %s32
          %s328 = ssub.s32 2048, 2048
          %329 = vsyncadd %s322, %s328
          %s330 = smul.addr %s33, 32
          %s331 = sadd.s32 %s326, %s330
          %s332 = smul.addr %s331, 64
          %s333 = scalar_lea.hbm %s0, %s332
          %s334 = sshll.u32 %s325, 4
          %s335 = int_to_ptr.vmem [resolvable:$true] %s334
          %340 = dma.hbm_to_vmem [thread:$0]  %s333, 2048, %s335, %s322, 64, 64, 4
        $region36: #{tpu_custom_call.1} parent=31 // pred_fallthru
          _
      $region32: #{tpu_custom_call.1} parent=5 // pred_fallthru
        _
      %p341 = scmp.le.s32.totalorder 1, %s25
      %p342 = scmp.lt.s32.totalorder %s25, 3
      %p343 = pnand %p341, %p342
      %p344 = pneg %p343
      // Predicated region
      $region37: #{tpu_custom_call.1} parent=5 // pred_check
        _
      $region38: #{tpu_custom_call.1} parent=5 // pred_check_branch
        %346 = sbr.rel (%p343) target = $region40
      $region39: #{tpu_custom_call.1} parent=5 // pred_region
        %s347 = ssub.s32 %s25, 1
        %s348 = sand.u32 %s52, 1
        %s349 = scalar_lea.sflag [#allocation3], %s348
        %s350 = sand.u32 %s52, 1
        %s351 = smul.addr %s350, 128
        %s352 = scalar_lea.vmem [#allocation2], %s351
        // Predicated region
        $region41: #{tpu_custom_call.1} parent=39 // pred_check
          %p353 = pneg %p65
        $region42: #{tpu_custom_call.1} parent=39 // pred_check_branch
          %355 = sbr.rel (%p353) target = $region44
        $region43: #{tpu_custom_call.1} parent=39 // pred_region
          %356 = dma.done %s349, 2048
        $region44: #{tpu_custom_call.1} parent=39 // pred_fallthru
          _
        // Predicated region
        $region45: #{tpu_custom_call.1} parent=39 // pred_check
          %p357 = pneg %p91
        $region46: #{tpu_custom_call.1} parent=39 // pred_check_branch
          %359 = sbr.rel (%p357) target = $region48
        $region47: #{tpu_custom_call.1} parent=39 // pred_region
          %360 = dma.done [#allocation6], 4096
        $region48: #{tpu_custom_call.1} parent=39 // pred_fallthru
          _
        // Predicated region
        $region49: #{tpu_custom_call.1} parent=39 // pred_check
          %p361 = pneg %p117
        $region50: #{tpu_custom_call.1} parent=39 // pred_check_branch
          %363 = sbr.rel (%p361) target = $region52
        $region51: #{tpu_custom_call.1} parent=39 // pred_region
          %364 = dma.done [#allocation6], 4096
        $region52: #{tpu_custom_call.1} parent=39 // pred_fallthru
          _
        // Predicated region
        $region53: #{tpu_custom_call.1} parent=39 // pred_check
          %p365 = pneg %p138
        $region54: #{tpu_custom_call.1} parent=39 // pred_check_branch
          %367 = sbr.rel (%p365) target = $region56
        $region55: #{tpu_custom_call.1} parent=39 // pred_region
          %368 = dma.done [#allocation9], 3072
        $region56: #{tpu_custom_call.1} parent=39 // pred_fallthru
          _
        // Predicated region
        $region57: #{tpu_custom_call.1} parent=39 // pred_check
          %p369 = pneg %p159
        $region58: #{tpu_custom_call.1} parent=39 // pred_check_branch
          %371 = sbr.rel (%p369) target = $region60
        $region59: #{tpu_custom_call.1} parent=39 // pred_region
          %372 = dma.done [#allocation9], 48
        $region60: #{tpu_custom_call.1} parent=39 // pred_fallthru
          _
        %s373 = sand.u32 %s52, 1
        %s374 = scalar_lea.sflag [#allocation3], %s373
        %s375 = sand.u32 %s52, 1
        %s376 = smul.addr %s375, 128
        %s377 = scalar_lea.vmem [#allocation2], %s376
        %p378 = pneg %p65
        %p379 = pneg %p62
        %p380 = pneg %p91
        %p381 = pneg %p88
        %p382 = pneg %p117
        %p383 = pneg %p114
        %p384 = pneg %p138
        %p385 = pneg %p135
        %p386 = pneg %p159
        %p387 = pneg %p156
        %p388 = pneg %p187
        %p389 = pneg %p184
        %s390 = sand.u32 %s174, 1
        %s391 = scalar_lea.sflag [#allocation4], %s390
        %s392 = sand.u32 %s174, 1
        %s393 = smul.addr %s392, 128
        %s394 = scalar_lea.vmem [#allocation11], %s393
        %p395 = pneg %p215
        %p396 = pneg %p212
        %s397 = sand.u32 %s30, 1
        %s398 = scalar_lea.sflag [#allocation13], %s397
        %s399 = sand.u32 %s202, 1
        %s400 = smul.addr %s399, 128
        %s401 = scalar_lea.vmem [#allocation12], %s400
        %p402 = pneg %p243
        %p403 = pneg %p240
        %s404 = sand.u32 %s30, 1
        %s405 = scalar_lea.sflag [#allocation13], %s404
        %s406 = sand.u32 %s230, 1
        %s407 = smul.addr %s406, 128
        %s408 = scalar_lea.vmem [#allocation14], %s407
        %s409 = smul.u32 32, %s34
        %s410 = smul.u32 32, %s34
        %s411 = smul.u32 32, %s34
        %s412 = smul.u32 32, %s34
        %s413 = smul.u32 32, %s34
        %s414 = smul.u32 32, %s34
        %v416 = vld [vmem:[%s352] sm:$0xf]
        %v417 = vld [vmem:[%s352 + $0x4] sm:$0xf]
        %v418 = vld [vmem:[%s352 + $0x8] sm:$0xf]
        %v419 = vld [vmem:[%s352 + $0xc] sm:$0xf]
        %v420 = vld [vmem:[%s352 + $0x10] sm:$0xf]
        %v421 = vld [vmem:[%s352 + $0x14] sm:$0xf]
        %v422 = vld [vmem:[%s352 + $0x18] sm:$0xf]
        %v423 = vld [vmem:[%s352 + $0x1c] sm:$0xf]
        %v424 = vld [vmem:[%s352 + $0x20] sm:$0xf]
        %v425 = vld [vmem:[%s352 + $0x24] sm:$0xf]
        %v426 = vld [vmem:[%s352 + $0x28] sm:$0xf]
        %v427 = vld [vmem:[%s352 + $0x2c] sm:$0xf]
        %v428 = vld [vmem:[%s352 + $0x30] sm:$0xf]
        %v429 = vld [vmem:[%s352 + $0x34] sm:$0xf]
        %v430 = vld [vmem:[%s352 + $0x38] sm:$0xf]
        %v431 = vld [vmem:[%s352 + $0x3c] sm:$0xf]
        %v432 = vld [vmem:[%s352 + $0x40] sm:$0xf]
        %v433 = vld [vmem:[%s352 + $0x44] sm:$0xf]
        %v434 = vld [vmem:[%s352 + $0x48] sm:$0xf]
        %v435 = vld [vmem:[%s352 + $0x4c] sm:$0xf]
        %v436 = vld [vmem:[%s352 + $0x50] sm:$0xf]
        %v437 = vld [vmem:[%s352 + $0x54] sm:$0xf]
        %v438 = vld [vmem:[%s352 + $0x58] sm:$0xf]
        %v439 = vld [vmem:[%s352 + $0x5c] sm:$0xf]
        %v440 = vld [vmem:[%s352 + $0x60] sm:$0xf]
        %v441 = vld [vmem:[%s352 + $0x64] sm:$0xf]
        %v442 = vld [vmem:[%s352 + $0x68] sm:$0xf]
        %v443 = vld [vmem:[%s352 + $0x6c] sm:$0xf]
        %v444 = vld [vmem:[%s352 + $0x70] sm:$0xf]
        %v445 = vld [vmem:[%s352 + $0x74] sm:$0xf]
        %v446 = vld [vmem:[%s352 + $0x78] sm:$0xf]
        %v447 = vld [vmem:[%s352 + $0x7c] sm:$0xf]
        %v448 = vld [vmem:[#allocation5] sm:$0xff]
        %v449 = vld [vmem:[#allocation5 + $0x8] sm:$0xff]
        %v450 = vld [vmem:[#allocation5 + $0x10] sm:$0xff]
        %v451 = vld [vmem:[#allocation5 + $0x18] sm:$0xff]
        %v452 = vld [vmem:[#allocation5 + $0x20] sm:$0xff]
        %v453 = vld [vmem:[#allocation5 + $0x28] sm:$0xff]
        %v454 = vld [vmem:[#allocation5 + $0x30] sm:$0xff]
        %v455 = vld [vmem:[#allocation5 + $0x38] sm:$0xff]
        %v456 = vld [vmem:[#allocation5 + $0x40] sm:$0xff]
        %v457 = vld [vmem:[#allocation5 + $0x48] sm:$0xff]
        %v458 = vld [vmem:[#allocation5 + $0x50] sm:$0xff]
        %v459 = vld [vmem:[#allocation5 + $0x58] sm:$0xff]
        %v460 = vld [vmem:[#allocation5 + $0x60] sm:$0xff]
        %v461 = vld [vmem:[#allocation5 + $0x68] sm:$0xff]
        %v462 = vld [vmem:[#allocation5 + $0x70] sm:$0xff]
        %v463 = vld [vmem:[#allocation5 + $0x78] sm:$0xff]
        %v464 = vld [vmem:[#allocation5 + $0x80] sm:$0xff]
        %v465 = vld [vmem:[#allocation5 + $0x88] sm:$0xff]
        %v466 = vld [vmem:[#allocation5 + $0x90] sm:$0xff]
        %v467 = vld [vmem:[#allocation5 + $0x98] sm:$0xff]
        %v468 = vld [vmem:[#allocation5 + $0xa0] sm:$0xff]
        %v469 = vld [vmem:[#allocation5 + $0xa8] sm:$0xff]
        %v470 = vld [vmem:[#allocation5 + $0xb0] sm:$0xff]
        %v471 = vld [vmem:[#allocation5 + $0xb8] sm:$0xff]
        %v472 = vld [vmem:[#allocation5 + $0xc0] sm:$0xff]
        %v473 = vld [vmem:[#allocation5 + $0xc8] sm:$0xff]
        %v474 = vld [vmem:[#allocation5 + $0xd0] sm:$0xff]
        %v475 = vld [vmem:[#allocation5 + $0xd8] sm:$0xff]
        %v476 = vld [vmem:[#allocation5 + $0xe0] sm:$0xff]
        %v477 = vld [vmem:[#allocation5 + $0xe8] sm:$0xff]
        %v478 = vld [vmem:[#allocation5 + $0xf0] sm:$0xff]
        %v479 = vld [vmem:[#allocation5 + $0xf8] sm:$0xff]
        %v480 = vld [vmem:[#allocation7] sm:$0xff]
        %v481 = vld [vmem:[#allocation7 + $0x8] sm:$0xff]
        %v482 = vld [vmem:[#allocation7 + $0x10] sm:$0xff]
        %v483 = vld [vmem:[#allocation7 + $0x18] sm:$0xff]
        %v484 = vld [vmem:[#allocation7 + $0x20] sm:$0xff]
        %v485 = vld [vmem:[#allocation7 + $0x28] sm:$0xff]
        %v486 = vld [vmem:[#allocation7 + $0x30] sm:$0xff]
        %v487 = vld [vmem:[#allocation7 + $0x38] sm:$0xff]
        %v488 = vld [vmem:[#allocation7 + $0x40] sm:$0xff]
        %v489 = vld [vmem:[#allocation7 + $0x48] sm:$0xff]
        %v490 = vld [vmem:[#allocation7 + $0x50] sm:$0xff]
        %v491 = vld [vmem:[#allocation7 + $0x58] sm:$0xff]
        %v492 = vld [vmem:[#allocation7 + $0x60] sm:$0xff]
        %v493 = vld [vmem:[#allocation7 + $0x68] sm:$0xff]
        %v494 = vld [vmem:[#allocation7 + $0x70] sm:$0xff]
        %v495 = vld [vmem:[#allocation7 + $0x78] sm:$0xff]
        %v496 = vld [vmem:[#allocation7 + $0x80] sm:$0xff]
        %v497 = vld [vmem:[#allocation7 + $0x88] sm:$0xff]
        %v498 = vld [vmem:[#allocation7 + $0x90] sm:$0xff]
        %v499 = vld [vmem:[#allocation7 + $0x98] sm:$0xff]
        %v500 = vld [vmem:[#allocation7 + $0xa0] sm:$0xff]
        %v501 = vld [vmem:[#allocation7 + $0xa8] sm:$0xff]
        %v502 = vld [vmem:[#allocation7 + $0xb0] sm:$0xff]
        %v503 = vld [vmem:[#allocation7 + $0xb8] sm:$0xff]
        %v504 = vld [vmem:[#allocation7 + $0xc0] sm:$0xff]
        %v505 = vld [vmem:[#allocation7 + $0xc8] sm:$0xff]
        %v506 = vld [vmem:[#allocation7 + $0xd0] sm:$0xff]
        %v507 = vld [vmem:[#allocation7 + $0xd8] sm:$0xff]
        %v508 = vld [vmem:[#allocation7 + $0xe0] sm:$0xff]
        %v509 = vld [vmem:[#allocation7 + $0xe8] sm:$0xff]
        %v510 = vld [vmem:[#allocation7 + $0xf0] sm:$0xff]
        %v511 = vld [vmem:[#allocation7 + $0xf8] sm:$0xff]
        %v512 = vld [vmem:[#allocation8] sm:$0xff]
        %v513 = vld [vmem:[#allocation8 + $0x8] sm:$0xf]
        %v514 = vld [vmem:[#allocation8 + $0xc] sm:$0xff]
        %v515 = vld [vmem:[#allocation8 + $0x14] sm:$0xf]
        %v516 = vld [vmem:[#allocation8 + $0x18] sm:$0xff]
        %v517 = vld [vmem:[#allocation8 + $0x20] sm:$0xf]
        %v518 = vld [vmem:[#allocation8 + $0x24] sm:$0xff]
        %v519 = vld [vmem:[#allocation8 + $0x2c] sm:$0xf]
        %v520 = vld [vmem:[#allocation8 + $0x30] sm:$0xff]
        %v521 = vld [vmem:[#allocation8 + $0x38] sm:$0xf]
        %v522 = vld [vmem:[#allocation8 + $0x3c] sm:$0xff]
        %v523 = vld [vmem:[#allocation8 + $0x44] sm:$0xf]
        %v524 = vld [vmem:[#allocation8 + $0x48] sm:$0xff]
        %v525 = vld [vmem:[#allocation8 + $0x50] sm:$0xf]
        %v526 = vld [vmem:[#allocation8 + $0x54] sm:$0xff]
        %v527 = vld [vmem:[#allocation8 + $0x5c] sm:$0xf]
        %v528 = vld [vmem:[#allocation8 + $0x60] sm:$0xff]
        %v529 = vld [vmem:[#allocation8 + $0x68] sm:$0xf]
        %v530 = vld [vmem:[#allocation8 + $0x6c] sm:$0xff]
        %v531 = vld [vmem:[#allocation8 + $0x74] sm:$0xf]
        %v532 = vld [vmem:[#allocation8 + $0x78] sm:$0xff]
        %v533 = vld [vmem:[#allocation8 + $0x80] sm:$0xf]
        %v534 = vld [vmem:[#allocation8 + $0x84] sm:$0xff]
        %v535 = vld [vmem:[#allocation8 + $0x8c] sm:$0xf]
        %v536 = vld [vmem:[#allocation8 + $0x90] sm:$0xff]
        %v537 = vld [vmem:[#allocation8 + $0x98] sm:$0xf]
        %v538 = vld [vmem:[#allocation8 + $0x9c] sm:$0xff]
        %v539 = vld [vmem:[#allocation8 + $0xa4] sm:$0xf]
        %v540 = vld [vmem:[#allocation8 + $0xa8] sm:$0xff]
        %v541 = vld [vmem:[#allocation8 + $0xb0] sm:$0xf]
        %v542 = vld [vmem:[#allocation8 + $0xb4] sm:$0xff]
        %v543 = vld [vmem:[#allocation8 + $0xbc] sm:$0xf]
        %v544 = vld [vmem:[#allocation10] sm:$0x7]
        %v546 = vlaneseq
        %v547 = vshrl.u32 %v546, 7
        %v548 = vsub.s32 0, %v547
        %v549 = vrot.slane %v544, %v548
        %v550 = vlaneseq
        %v551 = vshrl.u32 %v550, 7
        %v552 = vsub.s32 1, %v551
        %v553 = vrot.slane %v544, %v552
        %v554 = vlaneseq
        %v555 = vshrl.u32 %v554, 7
        %v556 = vsub.s32 2, %v555
        %v557 = vrot.slane %v544, %v556
        %v593 = vunpack.c.l.b16 %v416
        %v594 = vunpack.c.l.b16 %v417
        %v595 = vunpack.c.l.b16 %v418
        %v596 = vunpack.c.l.b16 %v419
        %v597 = vunpack.c.l.b16 %v420
        %v598 = vunpack.c.l.b16 %v421
        %v599 = vunpack.c.l.b16 %v422
        %v600 = vunpack.c.l.b16 %v423
        %v601 = vunpack.c.l.b16 %v424
        %v602 = vunpack.c.l.b16 %v425
        %v603 = vunpack.c.l.b16 %v426
        %v604 = vunpack.c.l.b16 %v427
        %v605 = vunpack.c.l.b16 %v428
        %v606 = vunpack.c.l.b16 %v429
        %v607 = vunpack.c.l.b16 %v430
        %v608 = vunpack.c.l.b16 %v431
        %v609 = vunpack.c.l.b16 %v432
        %v610 = vunpack.c.l.b16 %v433
        %v611 = vunpack.c.l.b16 %v434
        %v612 = vunpack.c.l.b16 %v435
        %v613 = vunpack.c.l.b16 %v436
        %v614 = vunpack.c.l.b16 %v437
        %v615 = vunpack.c.l.b16 %v438
        %v616 = vunpack.c.l.b16 %v439
        %v617 = vunpack.c.l.b16 %v440
        %v618 = vunpack.c.l.b16 %v441
        %v619 = vunpack.c.l.b16 %v442
        %v620 = vunpack.c.l.b16 %v443
        %v621 = vunpack.c.l.b16 %v444
        %v622 = vunpack.c.l.b16 %v445
        %v623 = vunpack.c.l.b16 %v446
        %v624 = vunpack.c.l.b16 %v447
        %v625 = vpack.c.b16 %v594, %v593
        %v626 = vpack.c.b16 %v596, %v595
        %v627 = vpack.c.b16 %v598, %v597
        %v628 = vpack.c.b16 %v600, %v599
        %v629 = vpack.c.b16 %v602, %v601
        %v630 = vpack.c.b16 %v604, %v603
        %v631 = vpack.c.b16 %v606, %v605
        %v632 = vpack.c.b16 %v608, %v607
        %v633 = vpack.c.b16 %v610, %v609
        %v634 = vpack.c.b16 %v612, %v611
        %v635 = vpack.c.b16 %v614, %v613
        %v636 = vpack.c.b16 %v616, %v615
        %v637 = vpack.c.b16 %v618, %v617
        %v638 = vpack.c.b16 %v620, %v619
        %v639 = vpack.c.b16 %v622, %v621
        %v640 = vpack.c.b16 %v624, %v623
        %v689 = vunpack.c.l.b16 %v512
        %v690 = vunpack.c.h.b16 %v512
        %v691 = vunpack.c.l.b16 %v513
        %v692 = vunpack.c.l.b16 %v514
        %v693 = vunpack.c.h.b16 %v514
        %v694 = vunpack.c.l.b16 %v515
        %v695 = vunpack.c.l.b16 %v516
        %v696 = vunpack.c.h.b16 %v516
        %v697 = vunpack.c.l.b16 %v517
        %v698 = vunpack.c.l.b16 %v518
        %v699 = vunpack.c.h.b16 %v518
        %v700 = vunpack.c.l.b16 %v519
        %v701 = vunpack.c.l.b16 %v520
        %v702 = vunpack.c.h.b16 %v520
        %v703 = vunpack.c.l.b16 %v521
        %v704 = vunpack.c.l.b16 %v522
        %v705 = vunpack.c.h.b16 %v522
        %v706 = vunpack.c.l.b16 %v523
        %v707 = vunpack.c.l.b16 %v524
        %v708 = vunpack.c.h.b16 %v524
        %v709 = vunpack.c.l.b16 %v525
        %v710 = vunpack.c.l.b16 %v526
        %v711 = vunpack.c.h.b16 %v526
        %v712 = vunpack.c.l.b16 %v527
        %v713 = vunpack.c.l.b16 %v528
        %v714 = vunpack.c.h.b16 %v528
        %v715 = vunpack.c.l.b16 %v529
        %v716 = vunpack.c.l.b16 %v530
        %v717 = vunpack.c.h.b16 %v530
        %v718 = vunpack.c.l.b16 %v531
        %v719 = vunpack.c.l.b16 %v532
        %v720 = vunpack.c.h.b16 %v532
        %v721 = vunpack.c.l.b16 %v533
        %v722 = vunpack.c.l.b16 %v534
        %v723 = vunpack.c.h.b16 %v534
        %v724 = vunpack.c.l.b16 %v535
        %v725 = vunpack.c.l.b16 %v536
        %v726 = vunpack.c.h.b16 %v536
        %v727 = vunpack.c.l.b16 %v537
        %v728 = vunpack.c.l.b16 %v538
        %v729 = vunpack.c.h.b16 %v538
        %v730 = vunpack.c.l.b16 %v539
        %v731 = vunpack.c.l.b16 %v540
        %v732 = vunpack.c.h.b16 %v540
        %v733 = vunpack.c.l.b16 %v541
        %v734 = vunpack.c.l.b16 %v542
        %v735 = vunpack.c.h.b16 %v542
        %v736 = vunpack.c.l.b16 %v543
        %v737 = vpack.c.b16 %v692, %v689
        %v738 = vpack.c.b16 %v693, %v690
        %v739 = vpack.c.b16 %v694, %v691
        %v740 = vpack.c.b16 %v698, %v695
        %v741 = vpack.c.b16 %v699, %v696
        %v742 = vpack.c.b16 %v700, %v697
        %v743 = vpack.c.b16 %v704, %v701
        %v744 = vpack.c.b16 %v705, %v702
        %v745 = vpack.c.b16 %v706, %v703
        %v746 = vpack.c.b16 %v710, %v707
        %v747 = vpack.c.b16 %v711, %v708
        %v748 = vpack.c.b16 %v712, %v709
        %v749 = vpack.c.b16 %v716, %v713
        %v750 = vpack.c.b16 %v717, %v714
        %v751 = vpack.c.b16 %v718, %v715
        %v752 = vpack.c.b16 %v722, %v719
        %v753 = vpack.c.b16 %v723, %v720
        %v754 = vpack.c.b16 %v724, %v721
        %v755 = vpack.c.b16 %v728, %v725
        %v756 = vpack.c.b16 %v729, %v726
        %v757 = vpack.c.b16 %v730, %v727
        %v758 = vpack.c.b16 %v734, %v731
        %v759 = vpack.c.b16 %v735, %v732
        %v760 = vpack.c.b16 %v736, %v733
        %785 = vmatprep.subr.bf16.mxu0 %v738
        %786 = vmatpush1.bf16.msra.mxu0 %v737
        %787 = vmatprep.subr.bf16.mxu0 %v741
        %788 = vmatpush1.bf16.msra.mxu0 %v740
        %789 = vmatprep.subr.bf16.mxu0 %v744
        %790 = vmatpush1.bf16.msra.mxu0 %v743
        %791 = vmatprep.subr.bf16.mxu0 %v747
        %792 = vmatpush1.bf16.msra.mxu0 %v746
        %793 = vmatprep.subr.bf16.mxu0 %v750
        %794 = vmatpush1.bf16.msra.mxu0 %v749
        %795 = vmatprep.subr.bf16.mxu0 %v753
        %796 = vmatpush1.bf16.msra.mxu0 %v752
        %797 = vmatprep.subr.bf16.mxu0 %v756
        %798 = vmatpush1.bf16.msra.mxu0 %v755
        %799 = vmatprep.subr.bf16.mxu0 %v759
        %800 = vmatpush1.bf16.msra.mxu0 %v758
        %801 = vmatprep.subr.bf16.mxu0 0
        %802 = vmatpush1.bf16.msra.mxu0 0
        %803 = vmatprep.subr.bf16.mxu0 0
        %804 = vmatpush1.bf16.msra.mxu0 0
        %805 = vmatprep.subr.bf16.mxu0 0
        %806 = vmatpush1.bf16.msra.mxu0 0
        %807 = vmatprep.subr.bf16.mxu0 0
        %808 = vmatpush1.bf16.msra.mxu0 0
        %809 = vmatprep.subr.bf16.mxu0 0
        %810 = vmatpush1.bf16.msra.mxu0 0
        %811 = vmatprep.subr.bf16.mxu0 0
        %812 = vmatpush1.bf16.msra.mxu0 0
        %813 = vmatprep.subr.bf16.mxu0 0
        %814 = vmatpush1.bf16.msra.mxu0 0
        %815 = vmatprep.subr.bf16.mxu0 0
        %816 = vmatpush1.bf16.msra.mxu0 0
        %817 = vmatprep.mubr.bf16.mxu0 0
        %818 = vmatmul.mubr.bf16.gmra.mrb[0].mxu0 %v625
        %v819 = vpop.f32.mrb[0].mxu0
        %v820 = vadd.f32 %v549, %v819
        %v821 = vpop.f32.mrb[0].mxu0
        %v822 = vadd.f32 %v553, %v821
        %v823 = vpop.f32.mrb[0].mxu0
        %v824 = vadd.f32 %v549, %v823
        %v825 = vpop.f32.mrb[0].mxu0
        %v826 = vadd.f32 %v553, %v825
        %827 = vmatprep.mubr.bf16.mxu0 0
        %828 = vmatmul.mubr.bf16.gmra.mrb[0].mxu0 %v626
        %v829 = vpop.f32.mrb[0].mxu0
        %v830 = vadd.f32 %v549, %v829
        %v831 = vpop.f32.mrb[0].mxu0
        %v832 = vadd.f32 %v553, %v831
        %v833 = vpop.f32.mrb[0].mxu0
        %v834 = vadd.f32 %v549, %v833
        %v835 = vpop.f32.mrb[0].mxu0
        %v836 = vadd.f32 %v553, %v835
        %837 = vmatprep.mubr.bf16.mxu0 0
        %838 = vmatmul.mubr.bf16.gmra.mrb[0].mxu0 %v627
        %v839 = vpop.f32.mrb[0].mxu0
        %v840 = vadd.f32 %v549, %v839
        %v841 = vpop.f32.mrb[0].mxu0
        %v842 = vadd.f32 %v553, %v841
        %v843 = vpop.f32.mrb[0].mxu0
        %v844 = vadd.f32 %v549, %v843
        %v845 = vpop.f32.mrb[0].mxu0
        %v846 = vadd.f32 %v553, %v845
        %847 = vmatprep.mubr.bf16.mxu0 0
        %848 = vmatmul.mubr.bf16.gmra.mrb[0].mxu0 %v628
        %v849 = vpop.f32.mrb[0].mxu0
        %v850 = vadd.f32 %v549, %v849
        %v851 = vpop.f32.mrb[0].mxu0
        %v852 = vadd.f32 %v553, %v851
        %v853 = vpop.f32.mrb[0].mxu0
        %v854 = vadd.f32 %v549, %v853
        %v855 = vpop.f32.mrb[0].mxu0
        %v856 = vadd.f32 %v553, %v855
        %857 = vmatprep.mubr.bf16.mxu0 0
        %858 = vmatmul.mubr.bf16.gmra.mrb[0].mxu0 %v629
        %v859 = vpop.f32.mrb[0].mxu0
        %v860 = vadd.f32 %v549, %v859
        %v861 = vpop.f32.mrb[0].mxu0
        %v862 = vadd.f32 %v553, %v861
        %v863 = vpop.f32.mrb[0].mxu0
        %v864 = vadd.f32 %v549, %v863
        %v865 = vpop.f32.mrb[0].mxu0
        %v866 = vadd.f32 %v553, %v865
        %867 = vmatprep.mubr.bf16.mxu0 0
        %868 = vmatmul.mubr.bf16.gmra.mrb[0].mxu0 %v630
        %v869 = vpop.f32.mrb[0].mxu0
        %v870 = vadd.f32 %v549, %v869
        %v871 = vpop.f32.mrb[0].mxu0
        %v872 = vadd.f32 %v553, %v871
        %v873 = vpop.f32.mrb[0].mxu0
        %v874 = vadd.f32 %v549, %v873
        %v875 = vpop.f32.mrb[0].mxu0
        %v876 = vadd.f32 %v553, %v875
        %877 = vmatprep.mubr.bf16.mxu0 0
        %878 = vmatmul.mubr.bf16.gmra.mrb[0].mxu0 %v631
        %v879 = vpop.f32.mrb[0].mxu0
        %v880 = vadd.f32 %v549, %v879
        %v881 = vpop.f32.mrb[0].mxu0
        %v882 = vadd.f32 %v553, %v881
        %v883 = vpop.f32.mrb[0].mxu0
        %v884 = vadd.f32 %v549, %v883
        %v885 = vpop.f32.mrb[0].mxu0
        %v886 = vadd.f32 %v553, %v885
        %887 = vmatprep.mubr.bf16.mxu0 0
        %888 = vmatmul.mubr.bf16.gmra.mrb[0].mxu0 %v632
        %v889 = vpop.f32.mrb[0].mxu0
        %v890 = vadd.f32 %v549, %v889
        %v891 = vpop.f32.mrb[0].mxu0
        %v892 = vadd.f32 %v553, %v891
        %v893 = vpop.f32.mrb[0].mxu0
        %v894 = vadd.f32 %v549, %v893
        %v895 = vpop.f32.mrb[0].mxu0
        %v896 = vadd.f32 %v553, %v895
        %897 = vmatprep.mubr.bf16.mxu0 0
        %898 = vmatmul.mubr.bf16.gmra.mrb[0].mxu0 %v633
        %v899 = vpop.f32.mrb[0].mxu0
        %v900 = vadd.f32 %v549, %v899
        %v901 = vpop.f32.mrb[0].mxu0
        %v902 = vadd.f32 %v553, %v901
        %v903 = vpop.f32.mrb[0].mxu0
        %v904 = vadd.f32 %v549, %v903
        %v905 = vpop.f32.mrb[0].mxu0
        %v906 = vadd.f32 %v553, %v905
        %907 = vmatprep.mubr.bf16.mxu0 0
        %908 = vmatmul.mubr.bf16.gmra.mrb[0].mxu0 %v634
        %v909 = vpop.f32.mrb[0].mxu0
        %v910 = vadd.f32 %v549, %v909
        %v911 = vpop.f32.mrb[0].mxu0
        %v912 = vadd.f32 %v553, %v911
        %v913 = vpop.f32.mrb[0].mxu0
        %v914 = vadd.f32 %v549, %v913
        %v915 = vpop.f32.mrb[0].mxu0
        %v916 = vadd.f32 %v553, %v915
        %917 = vmatprep.mubr.bf16.mxu0 0
        %918 = vmatmul.mubr.bf16.gmra.mrb[0].mxu0 %v635
        %v919 = vpop.f32.mrb[0].mxu0
        %v920 = vadd.f32 %v549, %v919
        %v921 = vpop.f32.mrb[0].mxu0
        %v922 = vadd.f32 %v553, %v921
        %v923 = vpop.f32.mrb[0].mxu0
        %v924 = vadd.f32 %v549, %v923
        %v925 = vpop.f32.mrb[0].mxu0
        %v926 = vadd.f32 %v553, %v925
        %927 = vmatprep.mubr.bf16.mxu0 0
        %928 = vmatmul.mubr.bf16.gmra.mrb[0].mxu0 %v636
        %v929 = vpop.f32.mrb[0].mxu0
        %v930 = vadd.f32 %v549, %v929
        %v931 = vpop.f32.mrb[0].mxu0
        %v932 = vadd.f32 %v553, %v931
        %v933 = vpop.f32.mrb[0].mxu0
        %v934 = vadd.f32 %v549, %v933
        %v935 = vpop.f32.mrb[0].mxu0
        %v936 = vadd.f32 %v553, %v935
        %937 = vmatprep.mubr.bf16.mxu0 0
        %938 = vmatmul.mubr.bf16.gmra.mrb[0].mxu0 %v637
        %v939 = vpop.f32.mrb[0].mxu0
        %v940 = vadd.f32 %v549, %v939
        %v941 = vpop.f32.mrb[0].mxu0
        %v942 = vadd.f32 %v553, %v941
        %v943 = vpop.f32.mrb[0].mxu0
        %v944 = vadd.f32 %v549, %v943
        %v945 = vpop.f32.mrb[0].mxu0
        %v946 = vadd.f32 %v553, %v945
        %947 = vmatprep.mubr.bf16.mxu0 0
        %948 = vmatmul.mubr.bf16.gmra.mrb[0].mxu0 %v638
        %v949 = vpop.f32.mrb[0].mxu0
        %v950 = vadd.f32 %v549, %v949
        %v951 = vpop.f32.mrb[0].mxu0
        %v952 = vadd.f32 %v553, %v951
        %v953 = vpop.f32.mrb[0].mxu0
        %v954 = vadd.f32 %v549, %v953
        %v955 = vpop.f32.mrb[0].mxu0
        %v956 = vadd.f32 %v553, %v955
        %957 = vmatprep.mubr.bf16.mxu0 0
        %958 = vmatmul.mubr.bf16.gmra.mrb[0].mxu0 %v639
        %v959 = vpop.f32.mrb[0].mxu0
        %v960 = vadd.f32 %v549, %v959
        %v961 = vpop.f32.mrb[0].mxu0
        %v962 = vadd.f32 %v553, %v961
        %v963 = vpop.f32.mrb[0].mxu0
        %v964 = vadd.f32 %v549, %v963
        %v965 = vpop.f32.mrb[0].mxu0
        %v966 = vadd.f32 %v553, %v965
        %967 = vmatprep.mubr.bf16.mxu0 0
        %968 = vmatmul.mubr.bf16.gmra.mrb[0].mxu0 %v640
        %v969 = vpop.f32.mrb[0].mxu0
        %v970 = vadd.f32 %v549, %v969
        %v971 = vpop.f32.mrb[0].mxu0
        %v972 = vadd.f32 %v553, %v971
        %v973 = vpop.f32.mrb[0].mxu0
        %v974 = vadd.f32 %v549, %v973
        %v975 = vpop.f32.mrb[0].mxu0
        %v976 = vadd.f32 %v553, %v975
        %977 = vdwg.mxu0
        %978 = vmatprep.subr.bf16.mxu0 0
        %979 = vmatpush1.bf16.msra.mxu0 %v739
        %980 = vmatprep.subr.bf16.mxu0 0
        %981 = vmatpush1.bf16.msra.mxu0 %v742
        %982 = vmatprep.subr.bf16.mxu0 0
        %983 = vmatpush1.bf16.msra.mxu0 %v745
        %984 = vmatprep.subr.bf16.mxu0 0
        %985 = vmatpush1.bf16.msra.mxu0 %v748
        %986 = vmatprep.subr.bf16.mxu0 0
        %987 = vmatpush1.bf16.msra.mxu0 %v751
        %988 = vmatprep.subr.bf16.mxu0 0
        %989 = vmatpush1.bf16.msra.mxu0 %v754
        %990 = vmatprep.subr.bf16.mxu0 0
        %991 = vmatpush1.bf16.msra.mxu0 %v757
        %992 = vmatprep.subr.bf16.mxu0 0
        %993 = vmatpush1.bf16.msra.mxu0 %v760
        %994 = vmatprep.subr.bf16.mxu0 0
        %995 = vmatpush1.bf16.msra.mxu0 0
        %996 = vmatprep.subr.bf16.mxu0 0
        %997 = vmatpush1.bf16.msra.mxu0 0
        %998 = vmatprep.subr.bf16.mxu0 0
        %999 = vmatpush1.bf16.msra.mxu0 0
        %1000 = vmatprep.subr.bf16.mxu0 0
        %1001 = vmatpush1.bf16.msra.mxu0 0
        %1002 = vmatprep.subr.bf16.mxu0 0
        %1003 = vmatpush1.bf16.msra.mxu0 0
        %1004 = vmatprep.subr.bf16.mxu0 0
        %1005 = vmatpush1.bf16.msra.mxu0 0
        %1006 = vmatprep.subr.bf16.mxu0 0
        %1007 = vmatpush1.bf16.msra.mxu0 0
        %1008 = vmatprep.subr.bf16.mxu0 0
        %1009 = vmatpush1.bf16.msra.mxu0 0
        %1010 = vmatprep.mubr.bf16.mxu0 0
        %1011 = vmatmul.mubr.bf16.gmra.mrb[0].mxu0 %v625
        %v1012 = vpop.f32.mrb[0].mxu0
        %v1013 = vadd.f32 %v557, %v1012
        %v1014 = vpop.f32.mrb[0].mxu0
        %v1015 = vpop.f32.mrb[0].mxu0
        %v1016 = vadd.f32 %v557, %v1015
        %v1017 = vpop.f32.mrb[0].mxu0
        %1018 = vmatprep.mubr.bf16.mxu0 0
        %1019 = vmatmul.mubr.bf16.gmra.mrb[0].mxu0 %v626
        %v1020 = vpop.f32.mrb[0].mxu0
        %v1021 = vadd.f32 %v557, %v1020
        %v1022 = vpop.f32.mrb[0].mxu0
        %v1023 = vpop.f32.mrb[0].mxu0
        %v1024 = vadd.f32 %v557, %v1023
        %v1025 = vpop.f32.mrb[0].mxu0
        %1026 = vmatprep.mubr.bf16.mxu0 0
        %1027 = vmatmul.mubr.bf16.gmra.mrb[0].mxu0 %v627
        %v1028 = vpop.f32.mrb[0].mxu0
        %v1029 = vadd.f32 %v557, %v1028
        %v1030 = vpop.f32.mrb[0].mxu0
        %v1031 = vpop.f32.mrb[0].mxu0
        %v1032 = vadd.f32 %v557, %v1031
        %v1033 = vpop.f32.mrb[0].mxu0
        %1034 = vmatprep.mubr.bf16.mxu0 0
        %1035 = vmatmul.mubr.bf16.gmra.mrb[0].mxu0 %v628
        %v1036 = vpop.f32.mrb[0].mxu0
        %v1037 = vadd.f32 %v557, %v1036
        %v1038 = vpop.f32.mrb[0].mxu0
        %v1039 = vpop.f32.mrb[0].mxu0
        %v1040 = vadd.f32 %v557, %v1039
        %v1041 = vpop.f32.mrb[0].mxu0
        %1042 = vmatprep.mubr.bf16.mxu0 0
        %1043 = vmatmul.mubr.bf16.gmra.mrb[0].mxu0 %v629
        %v1044 = vpop.f32.mrb[0].mxu0
        %v1045 = vadd.f32 %v557, %v1044
        %v1046 = vpop.f32.mrb[0].mxu0
        %v1047 = vpop.f32.mrb[0].mxu0
        %v1048 = vadd.f32 %v557, %v1047
        %v1049 = vpop.f32.mrb[0].mxu0
        %1050 = vmatprep.mubr.bf16.mxu0 0
        %1051 = vmatmul.mubr.bf16.gmra.mrb[0].mxu0 %v630
        %v1052 = vpop.f32.mrb[0].mxu0
        %v1053 = vadd.f32 %v557, %v1052
        %v1054 = vpop.f32.mrb[0].mxu0
        %v1055 = vpop.f32.mrb[0].mxu0
        %v1056 = vadd.f32 %v557, %v1055
        %v1057 = vpop.f32.mrb[0].mxu0
        %1058 = vmatprep.mubr.bf16.mxu0 0
        %1059 = vmatmul.mubr.bf16.gmra.mrb[0].mxu0 %v631
        %v1060 = vpop.f32.mrb[0].mxu0
        %v1061 = vadd.f32 %v557, %v1060
        %v1062 = vpop.f32.mrb[0].mxu0
        %v1063 = vpop.f32.mrb[0].mxu0
        %v1064 = vadd.f32 %v557, %v1063
        %v1065 = vpop.f32.mrb[0].mxu0
        %1066 = vmatprep.mubr.bf16.mxu0 0
        %1067 = vmatmul.mubr.bf16.gmra.mrb[0].mxu0 %v632
        %v1068 = vpop.f32.mrb[0].mxu0
        %v1069 = vadd.f32 %v557, %v1068
        %v1070 = vpop.f32.mrb[0].mxu0
        %v1071 = vpop.f32.mrb[0].mxu0
        %v1072 = vadd.f32 %v557, %v1071
        %v1073 = vpop.f32.mrb[0].mxu0
        %1074 = vmatprep.mubr.bf16.mxu0 0
        %1075 = vmatmul.mubr.bf16.gmra.mrb[0].mxu0 %v633
        %v1076 = vpop.f32.mrb[0].mxu0
        %v1077 = vadd.f32 %v557, %v1076
        %v1078 = vpop.f32.mrb[0].mxu0
        %v1079 = vpop.f32.mrb[0].mxu0
        %v1080 = vadd.f32 %v557, %v1079
        %v1081 = vpop.f32.mrb[0].mxu0
        %1082 = vmatprep.mubr.bf16.mxu0 0
        %1083 = vmatmul.mubr.bf16.gmra.mrb[0].mxu0 %v634
        %v1084 = vpop.f32.mrb[0].mxu0
        %v1085 = vadd.f32 %v557, %v1084
        %v1086 = vpop.f32.mrb[0].mxu0
        %v1087 = vpop.f32.mrb[0].mxu0
        %v1088 = vadd.f32 %v557, %v1087
        %v1089 = vpop.f32.mrb[0].mxu0
        %1090 = vmatprep.mubr.bf16.mxu0 0
        %1091 = vmatmul.mubr.bf16.gmra.mrb[0].mxu0 %v635
        %v1092 = vpop.f32.mrb[0].mxu0
        %v1093 = vadd.f32 %v557, %v1092
        %v1094 = vpop.f32.mrb[0].mxu0
        %v1095 = vpop.f32.mrb[0].mxu0
        %v1096 = vadd.f32 %v557, %v1095
        %v1097 = vpop.f32.mrb[0].mxu0
        %1098 = vmatprep.mubr.bf16.mxu0 0
        %1099 = vmatmul.mubr.bf16.gmra.mrb[0].mxu0 %v636
        %v1100 = vpop.f32.mrb[0].mxu0
        %v1101 = vadd.f32 %v557, %v1100
        %v1102 = vpop.f32.mrb[0].mxu0
        %v1103 = vpop.f32.mrb[0].mxu0
        %v1104 = vadd.f32 %v557, %v1103
        %v1105 = vpop.f32.mrb[0].mxu0
        %1106 = vmatprep.mubr.bf16.mxu0 0
        %1107 = vmatmul.mubr.bf16.gmra.mrb[0].mxu0 %v637
        %v1108 = vpop.f32.mrb[0].mxu0
        %v1109 = vadd.f32 %v557, %v1108
        %v1110 = vpop.f32.mrb[0].mxu0
        %v1111 = vpop.f32.mrb[0].mxu0
        %v1112 = vadd.f32 %v557, %v1111
        %v1113 = vpop.f32.mrb[0].mxu0
        %1114 = vmatprep.mubr.bf16.mxu0 0
        %1115 = vmatmul.mubr.bf16.gmra.mrb[0].mxu0 %v638
        %v1116 = vpop.f32.mrb[0].mxu0
        %v1117 = vadd.f32 %v557, %v1116
        %v1118 = vpop.f32.mrb[0].mxu0
        %v1119 = vpop.f32.mrb[0].mxu0
        %v1120 = vadd.f32 %v557, %v1119
        %v1121 = vpop.f32.mrb[0].mxu0
        %1122 = vmatprep.mubr.bf16.mxu0 0
        %1123 = vmatmul.mubr.bf16.gmra.mrb[0].mxu0 %v639
        %v1124 = vpop.f32.mrb[0].mxu0
        %v1125 = vadd.f32 %v557, %v1124
        %v1126 = vpop.f32.mrb[0].mxu0
        %v1127 = vpop.f32.mrb[0].mxu0
        %v1128 = vadd.f32 %v557, %v1127
        %v1129 = vpop.f32.mrb[0].mxu0
        %1130 = vmatprep.mubr.bf16.mxu0 0
        %1131 = vmatmul.mubr.bf16.gmra.mrb[0].mxu0 %v640
        %v1132 = vpop.f32.mrb[0].mxu0
        %v1133 = vadd.f32 %v557, %v1132
        %v1134 = vpop.f32.mrb[0].mxu0
        %v1135 = vpop.f32.mrb[0].mxu0
        %v1136 = vadd.f32 %v557, %v1135
        %v1137 = vpop.f32.mrb[0].mxu0
        %1138 = vdwg.mxu0
        %v1139 = vmul.f32 %v820, %v448
        %v1140 = vmul.f32 %v824, %v449
        %v1141 = vmul.f32 %v830, %v450
        %v1142 = vmul.f32 %v834, %v451
        %v1143 = vmul.f32 %v840, %v452
        %v1144 = vmul.f32 %v844, %v453
        %v1145 = vmul.f32 %v850, %v454
        %v1146 = vmul.f32 %v854, %v455
        %v1147 = vmul.f32 %v860, %v456
        %v1148 = vmul.f32 %v864, %v457
        %v1149 = vmul.f32 %v870, %v458
        %v1150 = vmul.f32 %v874, %v459
        %v1151 = vmul.f32 %v880, %v460
        %v1152 = vmul.f32 %v884, %v461
        %v1153 = vmul.f32 %v890, %v462
        %v1154 = vmul.f32 %v894, %v463
        %v1155 = vmul.f32 %v900, %v464
        %v1156 = vmul.f32 %v904, %v465
        %v1157 = vmul.f32 %v910, %v466
        %v1158 = vmul.f32 %v914, %v467
        %v1159 = vmul.f32 %v920, %v468
        %v1160 = vmul.f32 %v924, %v469
        %v1161 = vmul.f32 %v930, %v470
        %v1162 = vmul.f32 %v934, %v471
        %v1163 = vmul.f32 %v940, %v472
        %v1164 = vmul.f32 %v944, %v473
        %v1165 = vmul.f32 %v950, %v474
        %v1166 = vmul.f32 %v954, %v475
        %v1167 = vmul.f32 %v960, %v476
        %v1168 = vmul.f32 %v964, %v477
        %v1169 = vmul.f32 %v970, %v478
        %v1170 = vmul.f32 %v974, %v479
        %1203 = vrot.lane.b32.xlu0 %v820, 64
        %v1204 = vpop.permute.xlu0 %1203
        %1205 = vrot.lane.b32.xlu0 %v824, 64
        %v1206 = vpop.permute.xlu0 %1205
        %1207 = vrot.lane.b32.xlu0 %v830, 64
        %v1208 = vpop.permute.xlu0 %1207
        %1209 = vrot.lane.b32.xlu0 %v834, 64
        %v1210 = vpop.permute.xlu0 %1209
        %1211 = vrot.lane.b32.xlu0 %v840, 64
        %v1212 = vpop.permute.xlu0 %1211
        %1213 = vrot.lane.b32.xlu0 %v844, 64
        %v1214 = vpop.permute.xlu0 %1213
        %1215 = vrot.lane.b32.xlu0 %v850, 64
        %v1216 = vpop.permute.xlu0 %1215
        %1217 = vrot.lane.b32.xlu0 %v854, 64
        %v1218 = vpop.permute.xlu0 %1217
        %1219 = vrot.lane.b32.xlu0 %v860, 64
        %v1220 = vpop.permute.xlu0 %1219
        %1221 = vrot.lane.b32.xlu0 %v864, 64
        %v1222 = vpop.permute.xlu0 %1221
        %1223 = vrot.lane.b32.xlu0 %v870, 64
        %v1224 = vpop.permute.xlu0 %1223
        %1225 = vrot.lane.b32.xlu0 %v874, 64
        %v1226 = vpop.permute.xlu0 %1225
        %1227 = vrot.lane.b32.xlu0 %v880, 64
        %v1228 = vpop.permute.xlu0 %1227
        %1229 = vrot.lane.b32.xlu0 %v884, 64
        %v1230 = vpop.permute.xlu0 %1229
        %1231 = vrot.lane.b32.xlu0 %v890, 64
        %v1232 = vpop.permute.xlu0 %1231
        %1233 = vrot.lane.b32.xlu0 %v894, 64
        %v1234 = vpop.permute.xlu0 %1233
        %1235 = vrot.lane.b32.xlu0 %v900, 64
        %v1236 = vpop.permute.xlu0 %1235
        %1237 = vrot.lane.b32.xlu0 %v904, 64
        %v1238 = vpop.permute.xlu0 %1237
        %1239 = vrot.lane.b32.xlu0 %v910, 64
        %v1240 = vpop.permute.xlu0 %1239
        %1241 = vrot.lane.b32.xlu0 %v914, 64
        %v1242 = vpop.permute.xlu0 %1241
        %1243 = vrot.lane.b32.xlu0 %v920, 64
        %v1244 = vpop.permute.xlu0 %1243
        %1245 = vrot.lane.b32.xlu0 %v924, 64
        %v1246 = vpop.permute.xlu0 %1245
        %1247 = vrot.lane.b32.xlu0 %v930, 64
        %v1248 = vpop.permute.xlu0 %1247
        %1249 = vrot.lane.b32.xlu0 %v934, 64
        %v1250 = vpop.permute.xlu0 %1249
        %1251 = vrot.lane.b32.xlu0 %v940, 64
        %v1252 = vpop.permute.xlu0 %1251
        %1253 = vrot.lane.b32.xlu0 %v944, 64
        %v1254 = vpop.permute.xlu0 %1253
        %1255 = vrot.lane.b32.xlu0 %v950, 64
        %v1256 = vpop.permute.xlu0 %1255
        %1257 = vrot.lane.b32.xlu0 %v954, 64
        %v1258 = vpop.permute.xlu0 %1257
        %1259 = vrot.lane.b32.xlu0 %v960, 64
        %v1260 = vpop.permute.xlu0 %1259
        %1261 = vrot.lane.b32.xlu0 %v964, 64
        %v1262 = vpop.permute.xlu0 %1261
        %1263 = vrot.lane.b32.xlu0 %v970, 64
        %v1264 = vpop.permute.xlu0 %1263
        %1265 = vrot.lane.b32.xlu0 %v974, 64
        %v1266 = vpop.permute.xlu0 %1265
        %v1299 = vmul.f32 %v1204, %v480
        %v1300 = vmul.f32 %v1206, %v481
        %v1301 = vmul.f32 %v1208, %v482
        %v1302 = vmul.f32 %v1210, %v483
        %v1303 = vmul.f32 %v1212, %v484
        %v1304 = vmul.f32 %v1214, %v485
        %v1305 = vmul.f32 %v1216, %v486
        %v1306 = vmul.f32 %v1218, %v487
        %v1307 = vmul.f32 %v1220, %v488
        %v1308 = vmul.f32 %v1222, %v489
        %v1309 = vmul.f32 %v1224, %v490
        %v1310 = vmul.f32 %v1226, %v491
        %v1311 = vmul.f32 %v1228, %v492
        %v1312 = vmul.f32 %v1230, %v493
        %v1313 = vmul.f32 %v1232, %v494
        %v1314 = vmul.f32 %v1234, %v495
        %v1315 = vmul.f32 %v1236, %v496
        %v1316 = vmul.f32 %v1238, %v497
        %v1317 = vmul.f32 %v1240, %v498
        %v1318 = vmul.f32 %v1242, %v499
        %v1319 = vmul.f32 %v1244, %v500
        %v1320 = vmul.f32 %v1246, %v501
        %v1321 = vmul.f32 %v1248, %v502
        %v1322 = vmul.f32 %v1250, %v503
        %v1323 = vmul.f32 %v1252, %v504
        %v1324 = vmul.f32 %v1254, %v505
        %v1325 = vmul.f32 %v1256, %v506
        %v1326 = vmul.f32 %v1258, %v507
        %v1327 = vmul.f32 %v1260, %v508
        %v1328 = vmul.f32 %v1262, %v509
        %v1329 = vmul.f32 %v1264, %v510
        %v1330 = vmul.f32 %v1266, %v511
        %v1331 = vadd.f32 %v1139, %v1299
        %v1332 = vadd.f32 %v1140, %v1300
        %v1333 = vadd.f32 %v1141, %v1301
        %v1334 = vadd.f32 %v1142, %v1302
        %v1335 = vadd.f32 %v1143, %v1303
        %v1336 = vadd.f32 %v1144, %v1304
        %v1337 = vadd.f32 %v1145, %v1305
        %v1338 = vadd.f32 %v1146, %v1306
        %v1339 = vadd.f32 %v1147, %v1307
        %v1340 = vadd.f32 %v1148, %v1308
        %v1341 = vadd.f32 %v1149, %v1309
        %v1342 = vadd.f32 %v1150, %v1310
        %v1343 = vadd.f32 %v1151, %v1311
        %v1344 = vadd.f32 %v1152, %v1312
        %v1345 = vadd.f32 %v1153, %v1313
        %v1346 = vadd.f32 %v1154, %v1314
        %v1347 = vadd.f32 %v1155, %v1315
        %v1348 = vadd.f32 %v1156, %v1316
        %v1349 = vadd.f32 %v1157, %v1317
        %v1350 = vadd.f32 %v1158, %v1318
        %v1351 = vadd.f32 %v1159, %v1319
        %v1352 = vadd.f32 %v1160, %v1320
        %v1353 = vadd.f32 %v1161, %v1321
        %v1354 = vadd.f32 %v1162, %v1322
        %v1355 = vadd.f32 %v1163, %v1323
        %v1356 = vadd.f32 %v1164, %v1324
        %v1357 = vadd.f32 %v1165, %v1325
        %v1358 = vadd.f32 %v1166, %v1326
        %v1359 = vadd.f32 %v1167, %v1327
        %v1360 = vadd.f32 %v1168, %v1328
        %v1361 = vadd.f32 %v1169, %v1329
        %v1362 = vadd.f32 %v1170, %v1330
        %v1363 = vpack.c.bf16 %v1332, %v1331
        %v1364 = vpack.c.bf16 %v1334, %v1333
        %v1365 = vpack.c.bf16 %v1336, %v1335
        %v1366 = vpack.c.bf16 %v1338, %v1337
        %v1367 = vpack.c.bf16 %v1340, %v1339
        %v1368 = vpack.c.bf16 %v1342, %v1341
        %v1369 = vpack.c.bf16 %v1344, %v1343
        %v1370 = vpack.c.bf16 %v1346, %v1345
        %v1371 = vpack.c.bf16 %v1348, %v1347
        %v1372 = vpack.c.bf16 %v1350, %v1349
        %v1373 = vpack.c.bf16 %v1352, %v1351
        %v1374 = vpack.c.bf16 %v1354, %v1353
        %v1375 = vpack.c.bf16 %v1356, %v1355
        %v1376 = vpack.c.bf16 %v1358, %v1357
        %v1377 = vpack.c.bf16 %v1360, %v1359
        %v1378 = vpack.c.bf16 %v1362, %v1361
        %v1395 = vunpack.c.l.b16 %v1363
        %v1396 = vunpack.c.h.b16 %v1363
        %v1397 = vunpack.c.l.b16 %v1364
        %v1398 = vunpack.c.h.b16 %v1364
        %v1399 = vunpack.c.l.b16 %v1365
        %v1400 = vunpack.c.h.b16 %v1365
        %v1401 = vunpack.c.l.b16 %v1366
        %v1402 = vunpack.c.h.b16 %v1366
        %v1403 = vunpack.c.l.b16 %v1367
        %v1404 = vunpack.c.h.b16 %v1367
        %v1405 = vunpack.c.l.b16 %v1368
        %v1406 = vunpack.c.h.b16 %v1368
        %v1407 = vunpack.c.l.b16 %v1369
        %v1408 = vunpack.c.h.b16 %v1369
        %v1409 = vunpack.c.l.b16 %v1370
        %v1410 = vunpack.c.h.b16 %v1370
        %v1411 = vunpack.c.l.b16 %v1371
        %v1412 = vunpack.c.h.b16 %v1371
        %v1413 = vunpack.c.l.b16 %v1372
        %v1414 = vunpack.c.h.b16 %v1372
        %v1415 = vunpack.c.l.b16 %v1373
        %v1416 = vunpack.c.h.b16 %v1373
        %v1417 = vunpack.c.l.b16 %v1374
        %v1418 = vunpack.c.h.b16 %v1374
        %v1419 = vunpack.c.l.b16 %v1375
        %v1420 = vunpack.c.h.b16 %v1375
        %v1421 = vunpack.c.l.b16 %v1376
        %v1422 = vunpack.c.h.b16 %v1376
        %v1423 = vunpack.c.l.b16 %v1377
        %v1424 = vunpack.c.h.b16 %v1377
        %v1425 = vunpack.c.l.b16 %v1378
        %v1426 = vunpack.c.h.b16 %v1378
        %v1427 = vpack.c.b16 %v1395, %v1395
        %v1428 = vpack.c.b16 %v1396, %v1396
        %v1429 = vpack.c.b16 %v1397, %v1397
        %v1430 = vpack.c.b16 %v1398, %v1398
        %v1431 = vpack.c.b16 %v1399, %v1399
        %v1432 = vpack.c.b16 %v1400, %v1400
        %v1433 = vpack.c.b16 %v1401, %v1401
        %v1434 = vpack.c.b16 %v1402, %v1402
        %v1435 = vpack.c.b16 %v1403, %v1403
        %v1436 = vpack.c.b16 %v1404, %v1404
        %v1437 = vpack.c.b16 %v1405, %v1405
        %v1438 = vpack.c.b16 %v1406, %v1406
        %v1439 = vpack.c.b16 %v1407, %v1407
        %v1440 = vpack.c.b16 %v1408, %v1408
        %v1441 = vpack.c.b16 %v1409, %v1409
        %v1442 = vpack.c.b16 %v1410, %v1410
        %v1443 = vpack.c.b16 %v1411, %v1411
        %v1444 = vpack.c.b16 %v1412, %v1412
        %v1445 = vpack.c.b16 %v1413, %v1413
        %v1446 = vpack.c.b16 %v1414, %v1414
        %v1447 = vpack.c.b16 %v1415, %v1415
        %v1448 = vpack.c.b16 %v1416, %v1416
        %v1449 = vpack.c.b16 %v1417, %v1417
        %v1450 = vpack.c.b16 %v1418, %v1418
        %v1451 = vpack.c.b16 %v1419, %v1419
        %v1452 = vpack.c.b16 %v1420, %v1420
        %v1453 = vpack.c.b16 %v1421, %v1421
        %v1454 = vpack.c.b16 %v1422, %v1422
        %v1455 = vpack.c.b16 %v1423, %v1423
        %v1456 = vpack.c.b16 %v1424, %v1424
        %v1457 = vpack.c.b16 %v1425, %v1425
        %v1458 = vpack.c.b16 %v1426, %v1426
        %1491 = vst [vmem:[%s394] sm:$0xf] %v1427
        %1492 = vst [vmem:[%s394 + $0x4] sm:$0xf] %v1428
        %1493 = vst [vmem:[%s394 + $0x8] sm:$0xf] %v1429
        %1494 = vst [vmem:[%s394 + $0xc] sm:$0xf] %v1430
        %1495 = vst [vmem:[%s394 + $0x10] sm:$0xf] %v1431
        %1496 = vst [vmem:[%s394 + $0x14] sm:$0xf] %v1432
        %1497 = vst [vmem:[%s394 + $0x18] sm:$0xf] %v1433
        %1498 = vst [vmem:[%s394 + $0x1c] sm:$0xf] %v1434
        %1499 = vst [vmem:[%s394 + $0x20] sm:$0xf] %v1435
        %1500 = vst [vmem:[%s394 + $0x24] sm:$0xf] %v1436
        %1501 = vst [vmem:[%s394 + $0x28] sm:$0xf] %v1437
        %1502 = vst [vmem:[%s394 + $0x2c] sm:$0xf] %v1438
        %1503 = vst [vmem:[%s394 + $0x30] sm:$0xf] %v1439
        %1504 = vst [vmem:[%s394 + $0x34] sm:$0xf] %v1440
        %1505 = vst [vmem:[%s394 + $0x38] sm:$0xf] %v1441
        %1506 = vst [vmem:[%s394 + $0x3c] sm:$0xf] %v1442
        %1507 = vst [vmem:[%s394 + $0x40] sm:$0xf] %v1443
        %1508 = vst [vmem:[%s394 + $0x44] sm:$0xf] %v1444
        %1509 = vst [vmem:[%s394 + $0x48] sm:$0xf] %v1445
        %1510 = vst [vmem:[%s394 + $0x4c] sm:$0xf] %v1446
        %1511 = vst [vmem:[%s394 + $0x50] sm:$0xf] %v1447
        %1512 = vst [vmem:[%s394 + $0x54] sm:$0xf] %v1448
        %1513 = vst [vmem:[%s394 + $0x58] sm:$0xf] %v1449
        %1514 = vst [vmem:[%s394 + $0x5c] sm:$0xf] %v1450
        %1515 = vst [vmem:[%s394 + $0x60] sm:$0xf] %v1451
        %1516 = vst [vmem:[%s394 + $0x64] sm:$0xf] %v1452
        %1517 = vst [vmem:[%s394 + $0x68] sm:$0xf] %v1453
        %1518 = vst [vmem:[%s394 + $0x6c] sm:$0xf] %v1454
        %1519 = vst [vmem:[%s394 + $0x70] sm:$0xf] %v1455
        %1520 = vst [vmem:[%s394 + $0x74] sm:$0xf] %v1456
        %1521 = vst [vmem:[%s394 + $0x78] sm:$0xf] %v1457
        %1522 = vst [vmem:[%s394 + $0x7c] sm:$0xf] %v1458
        %v1523 = vmul.f32 %v822, %v448
        %v1524 = vmul.f32 %v826, %v449
        %v1525 = vmul.f32 %v832, %v450
        %v1526 = vmul.f32 %v836, %v451
        %v1527 = vmul.f32 %v842, %v452
        %v1528 = vmul.f32 %v846, %v453
        %v1529 = vmul.f32 %v852, %v454
        %v1530 = vmul.f32 %v856, %v455
        %v1531 = vmul.f32 %v862, %v456
        %v1532 = vmul.f32 %v866, %v457
        %v1533 = vmul.f32 %v872, %v458
        %v1534 = vmul.f32 %v876, %v459
        %v1535 = vmul.f32 %v882, %v460
        %v1536 = vmul.f32 %v886, %v461
        %v1537 = vmul.f32 %v892, %v462
        %v1538 = vmul.f32 %v896, %v463
        %v1539 = vmul.f32 %v902, %v464
        %v1540 = vmul.f32 %v906, %v465
        %v1541 = vmul.f32 %v912, %v466
        %v1542 = vmul.f32 %v916, %v467
        %v1543 = vmul.f32 %v922, %v468
        %v1544 = vmul.f32 %v926, %v469
        %v1545 = vmul.f32 %v932, %v470
        %v1546 = vmul.f32 %v936, %v471
        %v1547 = vmul.f32 %v942, %v472
        %v1548 = vmul.f32 %v946, %v473
        %v1549 = vmul.f32 %v952, %v474
        %v1550 = vmul.f32 %v956, %v475
        %v1551 = vmul.f32 %v962, %v476
        %v1552 = vmul.f32 %v966, %v477
        %v1553 = vmul.f32 %v972, %v478
        %v1554 = vmul.f32 %v976, %v479
        %1587 = vrot.lane.b32.xlu0 %v822, 64
        %v1588 = vpop.permute.xlu0 %1587
        %1589 = vrot.lane.b32.xlu0 %v826, 64
        %v1590 = vpop.permute.xlu0 %1589
        %1591 = vrot.lane.b32.xlu0 %v832, 64
        %v1592 = vpop.permute.xlu0 %1591
        %1593 = vrot.lane.b32.xlu0 %v836, 64
        %v1594 = vpop.permute.xlu0 %1593
        %1595 = vrot.lane.b32.xlu0 %v842, 64
        %v1596 = vpop.permute.xlu0 %1595
        %1597 = vrot.lane.b32.xlu0 %v846, 64
        %v1598 = vpop.permute.xlu0 %1597
        %1599 = vrot.lane.b32.xlu0 %v852, 64
        %v1600 = vpop.permute.xlu0 %1599
        %1601 = vrot.lane.b32.xlu0 %v856, 64
        %v1602 = vpop.permute.xlu0 %1601
        %1603 = vrot.lane.b32.xlu0 %v862, 64
        %v1604 = vpop.permute.xlu0 %1603
        %1605 = vrot.lane.b32.xlu0 %v866, 64
        %v1606 = vpop.permute.xlu0 %1605
        %1607 = vrot.lane.b32.xlu0 %v872, 64
        %v1608 = vpop.permute.xlu0 %1607
        %1609 = vrot.lane.b32.xlu0 %v876, 64
        %v1610 = vpop.permute.xlu0 %1609
        %1611 = vrot.lane.b32.xlu0 %v882, 64
        %v1612 = vpop.permute.xlu0 %1611
        %1613 = vrot.lane.b32.xlu0 %v886, 64
        %v1614 = vpop.permute.xlu0 %1613
        %1615 = vrot.lane.b32.xlu0 %v892, 64
        %v1616 = vpop.permute.xlu0 %1615
        %1617 = vrot.lane.b32.xlu0 %v896, 64
        %v1618 = vpop.permute.xlu0 %1617
        %1619 = vrot.lane.b32.xlu0 %v902, 64
        %v1620 = vpop.permute.xlu0 %1619
        %1621 = vrot.lane.b32.xlu0 %v906, 64
        %v1622 = vpop.permute.xlu0 %1621
        %1623 = vrot.lane.b32.xlu0 %v912, 64
        %v1624 = vpop.permute.xlu0 %1623
        %1625 = vrot.lane.b32.xlu0 %v916, 64
        %v1626 = vpop.permute.xlu0 %1625
        %1627 = vrot.lane.b32.xlu0 %v922, 64
        %v1628 = vpop.permute.xlu0 %1627
        %1629 = vrot.lane.b32.xlu0 %v926, 64
        %v1630 = vpop.permute.xlu0 %1629
        %1631 = vrot.lane.b32.xlu0 %v932, 64
        %v1632 = vpop.permute.xlu0 %1631
        %1633 = vrot.lane.b32.xlu0 %v936, 64
        %v1634 = vpop.permute.xlu0 %1633
        %1635 = vrot.lane.b32.xlu0 %v942, 64
        %v1636 = vpop.permute.xlu0 %1635
        %1637 = vrot.lane.b32.xlu0 %v946, 64
        %v1638 = vpop.permute.xlu0 %1637
        %1639 = vrot.lane.b32.xlu0 %v952, 64
        %v1640 = vpop.permute.xlu0 %1639
        %1641 = vrot.lane.b32.xlu0 %v956, 64
        %v1642 = vpop.permute.xlu0 %1641
        %1643 = vrot.lane.b32.xlu0 %v962, 64
        %v1644 = vpop.permute.xlu0 %1643
        %1645 = vrot.lane.b32.xlu0 %v966, 64
        %v1646 = vpop.permute.xlu0 %1645
        %1647 = vrot.lane.b32.xlu0 %v972, 64
        %v1648 = vpop.permute.xlu0 %1647
        %1649 = vrot.lane.b32.xlu0 %v976, 64
        %v1650 = vpop.permute.xlu0 %1649
        %v1683 = vmul.f32 %v1588, %v480
        %v1684 = vmul.f32 %v1590, %v481
        %v1685 = vmul.f32 %v1592, %v482
        %v1686 = vmul.f32 %v1594, %v483
        %v1687 = vmul.f32 %v1596, %v484
        %v1688 = vmul.f32 %v1598, %v485
        %v1689 = vmul.f32 %v1600, %v486
        %v1690 = vmul.f32 %v1602, %v487
        %v1691 = vmul.f32 %v1604, %v488
        %v1692 = vmul.f32 %v1606, %v489
        %v1693 = vmul.f32 %v1608, %v490
        %v1694 = vmul.f32 %v1610, %v491
        %v1695 = vmul.f32 %v1612, %v492
        %v1696 = vmul.f32 %v1614, %v493
        %v1697 = vmul.f32 %v1616, %v494
        %v1698 = vmul.f32 %v1618, %v495
        %v1699 = vmul.f32 %v1620, %v496
        %v1700 = vmul.f32 %v1622, %v497
        %v1701 = vmul.f32 %v1624, %v498
        %v1702 = vmul.f32 %v1626, %v499
        %v1703 = vmul.f32 %v1628, %v500
        %v1704 = vmul.f32 %v1630, %v501
        %v1705 = vmul.f32 %v1632, %v502
        %v1706 = vmul.f32 %v1634, %v503
        %v1707 = vmul.f32 %v1636, %v504
        %v1708 = vmul.f32 %v1638, %v505
        %v1709 = vmul.f32 %v1640, %v506
        %v1710 = vmul.f32 %v1642, %v507
        %v1711 = vmul.f32 %v1644, %v508
        %v1712 = vmul.f32 %v1646, %v509
        %v1713 = vmul.f32 %v1648, %v510
        %v1714 = vmul.f32 %v1650, %v511
        %v1715 = vadd.f32 %v1523, %v1683
        %v1716 = vadd.f32 %v1524, %v1684
        %v1717 = vadd.f32 %v1525, %v1685
        %v1718 = vadd.f32 %v1526, %v1686
        %v1719 = vadd.f32 %v1527, %v1687
        %v1720 = vadd.f32 %v1528, %v1688
        %v1721 = vadd.f32 %v1529, %v1689
        %v1722 = vadd.f32 %v1530, %v1690
        %v1723 = vadd.f32 %v1531, %v1691
        %v1724 = vadd.f32 %v1532, %v1692
        %v1725 = vadd.f32 %v1533, %v1693
        %v1726 = vadd.f32 %v1534, %v1694
        %v1727 = vadd.f32 %v1535, %v1695
        %v1728 = vadd.f32 %v1536, %v1696
        %v1729 = vadd.f32 %v1537, %v1697
        %v1730 = vadd.f32 %v1538, %v1698
        %v1731 = vadd.f32 %v1539, %v1699
        %v1732 = vadd.f32 %v1540, %v1700
        %v1733 = vadd.f32 %v1541, %v1701
        %v1734 = vadd.f32 %v1542, %v1702
        %v1735 = vadd.f32 %v1543, %v1703
        %v1736 = vadd.f32 %v1544, %v1704
        %v1737 = vadd.f32 %v1545, %v1705
        %v1738 = vadd.f32 %v1546, %v1706
        %v1739 = vadd.f32 %v1547, %v1707
        %v1740 = vadd.f32 %v1548, %v1708
        %v1741 = vadd.f32 %v1549, %v1709
        %v1742 = vadd.f32 %v1550, %v1710
        %v1743 = vadd.f32 %v1551, %v1711
        %v1744 = vadd.f32 %v1552, %v1712
        %v1745 = vadd.f32 %v1553, %v1713
        %v1746 = vadd.f32 %v1554, %v1714
        %v1747 = vpack.c.bf16 %v1716, %v1715
        %v1748 = vpack.c.bf16 %v1718, %v1717
        %v1749 = vpack.c.bf16 %v1720, %v1719
        %v1750 = vpack.c.bf16 %v1722, %v1721
        %v1751 = vpack.c.bf16 %v1724, %v1723
        %v1752 = vpack.c.bf16 %v1726, %v1725
        %v1753 = vpack.c.bf16 %v1728, %v1727
        %v1754 = vpack.c.bf16 %v1730, %v1729
        %v1755 = vpack.c.bf16 %v1732, %v1731
        %v1756 = vpack.c.bf16 %v1734, %v1733
        %v1757 = vpack.c.bf16 %v1736, %v1735
        %v1758 = vpack.c.bf16 %v1738, %v1737
        %v1759 = vpack.c.bf16 %v1740, %v1739
        %v1760 = vpack.c.bf16 %v1742, %v1741
        %v1761 = vpack.c.bf16 %v1744, %v1743
        %v1762 = vpack.c.bf16 %v1746, %v1745
        %v1779 = vunpack.c.l.b16 %v1747
        %v1780 = vunpack.c.h.b16 %v1747
        %v1781 = vunpack.c.l.b16 %v1748
        %v1782 = vunpack.c.h.b16 %v1748
        %v1783 = vunpack.c.l.b16 %v1749
        %v1784 = vunpack.c.h.b16 %v1749
        %v1785 = vunpack.c.l.b16 %v1750
        %v1786 = vunpack.c.h.b16 %v1750
        %v1787 = vunpack.c.l.b16 %v1751
        %v1788 = vunpack.c.h.b16 %v1751
        %v1789 = vunpack.c.l.b16 %v1752
        %v1790 = vunpack.c.h.b16 %v1752
        %v1791 = vunpack.c.l.b16 %v1753
        %v1792 = vunpack.c.h.b16 %v1753
        %v1793 = vunpack.c.l.b16 %v1754
        %v1794 = vunpack.c.h.b16 %v1754
        %v1795 = vunpack.c.l.b16 %v1755
        %v1796 = vunpack.c.h.b16 %v1755
        %v1797 = vunpack.c.l.b16 %v1756
        %v1798 = vunpack.c.h.b16 %v1756
        %v1799 = vunpack.c.l.b16 %v1757
        %v1800 = vunpack.c.h.b16 %v1757
        %v1801 = vunpack.c.l.b16 %v1758
        %v1802 = vunpack.c.h.b16 %v1758
        %v1803 = vunpack.c.l.b16 %v1759
        %v1804 = vunpack.c.h.b16 %v1759
        %v1805 = vunpack.c.l.b16 %v1760
        %v1806 = vunpack.c.h.b16 %v1760
        %v1807 = vunpack.c.l.b16 %v1761
        %v1808 = vunpack.c.h.b16 %v1761
        %v1809 = vunpack.c.l.b16 %v1762
        %v1810 = vunpack.c.h.b16 %v1762
        %v1811 = vpack.c.b16 %v1779, %v1779
        %v1812 = vpack.c.b16 %v1780, %v1780
        %v1813 = vpack.c.b16 %v1781, %v1781
        %v1814 = vpack.c.b16 %v1782, %v1782
        %v1815 = vpack.c.b16 %v1783, %v1783
        %v1816 = vpack.c.b16 %v1784, %v1784
        %v1817 = vpack.c.b16 %v1785, %v1785
        %v1818 = vpack.c.b16 %v1786, %v1786
        %v1819 = vpack.c.b16 %v1787, %v1787
        %v1820 = vpack.c.b16 %v1788, %v1788
        %v1821 = vpack.c.b16 %v1789, %v1789
        %v1822 = vpack.c.b16 %v1790, %v1790
        %v1823 = vpack.c.b16 %v1791, %v1791
        %v1824 = vpack.c.b16 %v1792, %v1792
        %v1825 = vpack.c.b16 %v1793, %v1793
        %v1826 = vpack.c.b16 %v1794, %v1794
        %v1827 = vpack.c.b16 %v1795, %v1795
        %v1828 = vpack.c.b16 %v1796, %v1796
        %v1829 = vpack.c.b16 %v1797, %v1797
        %v1830 = vpack.c.b16 %v1798, %v1798
        %v1831 = vpack.c.b16 %v1799, %v1799
        %v1832 = vpack.c.b16 %v1800, %v1800
        %v1833 = vpack.c.b16 %v1801, %v1801
        %v1834 = vpack.c.b16 %v1802, %v1802
        %v1835 = vpack.c.b16 %v1803, %v1803
        %v1836 = vpack.c.b16 %v1804, %v1804
        %v1837 = vpack.c.b16 %v1805, %v1805
        %v1838 = vpack.c.b16 %v1806, %v1806
        %v1839 = vpack.c.b16 %v1807, %v1807
        %v1840 = vpack.c.b16 %v1808, %v1808
        %v1841 = vpack.c.b16 %v1809, %v1809
        %v1842 = vpack.c.b16 %v1810, %v1810
        %1875 = vst [vmem:[%s401] sm:$0xf] %v1811
        %1876 = vst [vmem:[%s401 + $0x4] sm:$0xf] %v1812
        %1877 = vst [vmem:[%s401 + $0x8] sm:$0xf] %v1813
        %1878 = vst [vmem:[%s401 + $0xc] sm:$0xf] %v1814
        %1879 = vst [vmem:[%s401 + $0x10] sm:$0xf] %v1815
        %1880 = vst [vmem:[%s401 + $0x14] sm:$0xf] %v1816
        %1881 = vst [vmem:[%s401 + $0x18] sm:$0xf] %v1817
        %1882 = vst [vmem:[%s401 + $0x1c] sm:$0xf] %v1818
        %1883 = vst [vmem:[%s401 + $0x20] sm:$0xf] %v1819
        %1884 = vst [vmem:[%s401 + $0x24] sm:$0xf] %v1820
        %1885 = vst [vmem:[%s401 + $0x28] sm:$0xf] %v1821
        %1886 = vst [vmem:[%s401 + $0x2c] sm:$0xf] %v1822
        %1887 = vst [vmem:[%s401 + $0x30] sm:$0xf] %v1823
        %1888 = vst [vmem:[%s401 + $0x34] sm:$0xf] %v1824
        %1889 = vst [vmem:[%s401 + $0x38] sm:$0xf] %v1825
        %1890 = vst [vmem:[%s401 + $0x3c] sm:$0xf] %v1826
        %1891 = vst [vmem:[%s401 + $0x40] sm:$0xf] %v1827
        %1892 = vst [vmem:[%s401 + $0x44] sm:$0xf] %v1828
        %1893 = vst [vmem:[%s401 + $0x48] sm:$0xf] %v1829
        %1894 = vst [vmem:[%s401 + $0x4c] sm:$0xf] %v1830
        %1895 = vst [vmem:[%s401 + $0x50] sm:$0xf] %v1831
        %1896 = vst [vmem:[%s401 + $0x54] sm:$0xf] %v1832
        %1897 = vst [vmem:[%s401 + $0x58] sm:$0xf] %v1833
        %1898 = vst [vmem:[%s401 + $0x5c] sm:$0xf] %v1834
        %1899 = vst [vmem:[%s401 + $0x60] sm:$0xf] %v1835
        %1900 = vst [vmem:[%s401 + $0x64] sm:$0xf] %v1836
        %1901 = vst [vmem:[%s401 + $0x68] sm:$0xf] %v1837
        %1902 = vst [vmem:[%s401 + $0x6c] sm:$0xf] %v1838
        %1903 = vst [vmem:[%s401 + $0x70] sm:$0xf] %v1839
        %1904 = vst [vmem:[%s401 + $0x74] sm:$0xf] %v1840
        %1905 = vst [vmem:[%s401 + $0x78] sm:$0xf] %v1841
        %1906 = vst [vmem:[%s401 + $0x7c] sm:$0xf] %v1842
        %v1907 = vpack.c.bf16 %v1016, %v1013
        %v1908 = vpack.c.bf16 %v1024, %v1021
        %v1909 = vpack.c.bf16 %v1032, %v1029
        %v1910 = vpack.c.bf16 %v1040, %v1037
        %v1911 = vpack.c.bf16 %v1048, %v1045
        %v1912 = vpack.c.bf16 %v1056, %v1053
        %v1913 = vpack.c.bf16 %v1064, %v1061
        %v1914 = vpack.c.bf16 %v1072, %v1069
        %v1915 = vpack.c.bf16 %v1080, %v1077
        %v1916 = vpack.c.bf16 %v1088, %v1085
        %v1917 = vpack.c.bf16 %v1096, %v1093
        %v1918 = vpack.c.bf16 %v1104, %v1101
        %v1919 = vpack.c.bf16 %v1112, %v1109
        %v1920 = vpack.c.bf16 %v1120, %v1117
        %v1921 = vpack.c.bf16 %v1128, %v1125
        %v1922 = vpack.c.bf16 %v1136, %v1133
        %v1939 = vunpack.c.l.b16 %v1907
        %v1940 = vunpack.c.h.b16 %v1907
        %v1941 = vunpack.c.l.b16 %v1908
        %v1942 = vunpack.c.h.b16 %v1908
        %v1943 = vunpack.c.l.b16 %v1909
        %v1944 = vunpack.c.h.b16 %v1909
        %v1945 = vunpack.c.l.b16 %v1910
        %v1946 = vunpack.c.h.b16 %v1910
        %v1947 = vunpack.c.l.b16 %v1911
        %v1948 = vunpack.c.h.b16 %v1911
        %v1949 = vunpack.c.l.b16 %v1912
        %v1950 = vunpack.c.h.b16 %v1912
        %v1951 = vunpack.c.l.b16 %v1913
        %v1952 = vunpack.c.h.b16 %v1913
        %v1953 = vunpack.c.l.b16 %v1914
        %v1954 = vunpack.c.h.b16 %v1914
        %v1955 = vunpack.c.l.b16 %v1915
        %v1956 = vunpack.c.h.b16 %v1915
        %v1957 = vunpack.c.l.b16 %v1916
        %v1958 = vunpack.c.h.b16 %v1916
        %v1959 = vunpack.c.l.b16 %v1917
        %v1960 = vunpack.c.h.b16 %v1917
        %v1961 = vunpack.c.l.b16 %v1918
        %v1962 = vunpack.c.h.b16 %v1918
        %v1963 = vunpack.c.l.b16 %v1919
        %v1964 = vunpack.c.h.b16 %v1919
        %v1965 = vunpack.c.l.b16 %v1920
        %v1966 = vunpack.c.h.b16 %v1920
        %v1967 = vunpack.c.l.b16 %v1921
        %v1968 = vunpack.c.h.b16 %v1921
        %v1969 = vunpack.c.l.b16 %v1922
        %v1970 = vunpack.c.h.b16 %v1922
        %v1971 = vpack.c.b16 %v1939, %v1939
        %v1972 = vpack.c.b16 %v1940, %v1940
        %v1973 = vpack.c.b16 %v1941, %v1941
        %v1974 = vpack.c.b16 %v1942, %v1942
        %v1975 = vpack.c.b16 %v1943, %v1943
        %v1976 = vpack.c.b16 %v1944, %v1944
        %v1977 = vpack.c.b16 %v1945, %v1945
        %v1978 = vpack.c.b16 %v1946, %v1946
        %v1979 = vpack.c.b16 %v1947, %v1947
        %v1980 = vpack.c.b16 %v1948, %v1948
        %v1981 = vpack.c.b16 %v1949, %v1949
        %v1982 = vpack.c.b16 %v1950, %v1950
        %v1983 = vpack.c.b16 %v1951, %v1951
        %v1984 = vpack.c.b16 %v1952, %v1952
        %v1985 = vpack.c.b16 %v1953, %v1953
        %v1986 = vpack.c.b16 %v1954, %v1954
        %v1987 = vpack.c.b16 %v1955, %v1955
        %v1988 = vpack.c.b16 %v1956, %v1956
        %v1989 = vpack.c.b16 %v1957, %v1957
        %v1990 = vpack.c.b16 %v1958, %v1958
        %v1991 = vpack.c.b16 %v1959, %v1959
        %v1992 = vpack.c.b16 %v1960, %v1960
        %v1993 = vpack.c.b16 %v1961, %v1961
        %v1994 = vpack.c.b16 %v1962, %v1962
        %v1995 = vpack.c.b16 %v1963, %v1963
        %v1996 = vpack.c.b16 %v1964, %v1964
        %v1997 = vpack.c.b16 %v1965, %v1965
        %v1998 = vpack.c.b16 %v1966, %v1966
        %v1999 = vpack.c.b16 %v1967, %v1967
        %v2000 = vpack.c.b16 %v1968, %v1968
        %v2001 = vpack.c.b16 %v1969, %v1969
        %v2002 = vpack.c.b16 %v1970, %v1970
        %2035 = vst [vmem:[%s408] sm:$0xf] %v1971
        %2036 = vst [vmem:[%s408 + $0x4] sm:$0xf] %v1972
        %2037 = vst [vmem:[%s408 + $0x8] sm:$0xf] %v1973
        %2038 = vst [vmem:[%s408 + $0xc] sm:$0xf] %v1974
        %2039 = vst [vmem:[%s408 + $0x10] sm:$0xf] %v1975
        %2040 = vst [vmem:[%s408 + $0x14] sm:$0xf] %v1976
        %2041 = vst [vmem:[%s408 + $0x18] sm:$0xf] %v1977
        %2042 = vst [vmem:[%s408 + $0x1c] sm:$0xf] %v1978
        %2043 = vst [vmem:[%s408 + $0x20] sm:$0xf] %v1979
        %2044 = vst [vmem:[%s408 + $0x24] sm:$0xf] %v1980
        %2045 = vst [vmem:[%s408 + $0x28] sm:$0xf] %v1981
        %2046 = vst [vmem:[%s408 + $0x2c] sm:$0xf] %v1982
        %2047 = vst [vmem:[%s408 + $0x30] sm:$0xf] %v1983
        %2048 = vst [vmem:[%s408 + $0x34] sm:$0xf] %v1984
        %2049 = vst [vmem:[%s408 + $0x38] sm:$0xf] %v1985
        %2050 = vst [vmem:[%s408 + $0x3c] sm:$0xf] %v1986
        %2051 = vst [vmem:[%s408 + $0x40] sm:$0xf] %v1987
        %2052 = vst [vmem:[%s408 + $0x44] sm:$0xf] %v1988
        %2053 = vst [vmem:[%s408 + $0x48] sm:$0xf] %v1989
        %2054 = vst [vmem:[%s408 + $0x4c] sm:$0xf] %v1990
        %2055 = vst [vmem:[%s408 + $0x50] sm:$0xf] %v1991
        %2056 = vst [vmem:[%s408 + $0x54] sm:$0xf] %v1992
        %2057 = vst [vmem:[%s408 + $0x58] sm:$0xf] %v1993
        %2058 = vst [vmem:[%s408 + $0x5c] sm:$0xf] %v1994
        %2059 = vst [vmem:[%s408 + $0x60] sm:$0xf] %v1995
        %2060 = vst [vmem:[%s408 + $0x64] sm:$0xf] %v1996
        %2061 = vst [vmem:[%s408 + $0x68] sm:$0xf] %v1997
        %2062 = vst [vmem:[%s408 + $0x6c] sm:$0xf] %v1998
        %2063 = vst [vmem:[%s408 + $0x70] sm:$0xf] %v1999
        %2064 = vst [vmem:[%s408 + $0x74] sm:$0xf] %v2000
        %2065 = vst [vmem:[%s408 + $0x78] sm:$0xf] %v2001
        %2066 = vst [vmem:[%s408 + $0x7c] sm:$0xf] %v2002
        %s2067 = sand.u32 %s174, 1
        %s2068 = scalar_lea.sflag [#allocation4], %s2067
        %s2069 = sand.u32 %s174, 1
        %s2070 = smul.addr %s2069, 128
        %s2071 = scalar_lea.vmem [#allocation11], %s2070
        %s2072 = sand.u32 %s30, 1
        %s2073 = scalar_lea.sflag [#allocation13], %s2072
        %s2074 = sand.u32 %s202, 1
        %s2075 = smul.addr %s2074, 128
        %s2076 = scalar_lea.vmem [#allocation12], %s2075
        %s2077 = sand.u32 %s30, 1
        %s2078 = scalar_lea.sflag [#allocation13], %s2077
        %s2079 = sand.u32 %s230, 1
        %s2080 = smul.addr %s2079, 128
        %s2081 = scalar_lea.vmem [#allocation14], %s2080
        // Predicated region
        $region61: #{tpu_custom_call.1} parent=39 // pred_check
          %p2082 = pneg %p184
        $region62: #{tpu_custom_call.1} parent=39 // pred_check_branch
          %2084 = sbr.rel (%p2082) target = $region64
        $region63: #{tpu_custom_call.1} parent=39 // pred_region
          %s2085 = smul.u32 32, %s34
          %s2087 = ssub.s32 2048, 2048
          %2088 = vsyncadd %s2068, %s2087
          %s2089 = smul.addr %s35, 32
          %s2090 = sadd.s32 %s2085, %s2089
          %s2091 = smul.addr %s2090, 64
          %s2092 = scalar_lea.hbm %s5, %s2091
          %s2093 = sshll.u32 %s2071, 4
          %s2094 = int_to_ptr.vmem [resolvable:$true] %s2093
          %2099 = dma.vmem_to_hbm [thread:$0]  %s2094, 2048, %s2092, %s2068, 64, 64, 4
        $region64: #{tpu_custom_call.1} parent=39 // pred_fallthru
          _
        // Predicated region
        $region65: #{tpu_custom_call.1} parent=39 // pred_check
          %p2100 = pneg %p212
        $region66: #{tpu_custom_call.1} parent=39 // pred_check_branch
          %2102 = sbr.rel (%p2100) target = $region68
        $region67: #{tpu_custom_call.1} parent=39 // pred_region
          %s2103 = smul.u32 32, %s34
          %s2105 = ssub.s32 2048, 2048
          %2106 = vsyncadd %s2073, %s2105
          %s2107 = smul.addr %s35, 32
          %s2108 = sadd.s32 %s2103, %s2107
          %s2109 = smul.addr %s2108, 64
          %s2110 = scalar_lea.hbm %s6, %s2109
          %s2111 = sshll.u32 %s2076, 4
          %s2112 = int_to_ptr.vmem [resolvable:$true] %s2111
          %2117 = dma.vmem_to_hbm [thread:$0]  %s2112, 2048, %s2110, %s2073, 64, 64, 4
        $region68: #{tpu_custom_call.1} parent=39 // pred_fallthru
          _
        // Predicated region
        $region69: #{tpu_custom_call.1} parent=39 // pred_check
          %p2118 = pneg %p240
        $region70: #{tpu_custom_call.1} parent=39 // pred_check_branch
          %2120 = sbr.rel (%p2118) target = $region72
        $region71: #{tpu_custom_call.1} parent=39 // pred_region
          %s2121 = smul.u32 32, %s34
          %s2123 = ssub.s32 2048, 2048
          %2124 = vsyncadd %s2078, %s2123
          %s2125 = smul.addr %s35, 32
          %s2126 = sadd.s32 %s2121, %s2125
          %s2127 = smul.addr %s2126, 64
          %s2128 = scalar_lea.hbm %s7, %s2127
          %s2129 = sshll.u32 %s2081, 4
          %s2130 = int_to_ptr.vmem [resolvable:$true] %s2129
          %2135 = dma.vmem_to_hbm [thread:$0]  %s2130, 2048, %s2128, %s2078, 64, 64, 4
        $region72: #{tpu_custom_call.1} parent=39 // pred_fallthru
          _
      $region40: #{tpu_custom_call.1} parent=5 // pred_fallthru
        _
      %p2136 = scmp.le.s32.totalorder 2, %s25
      // Predicated region
      $region73: #{tpu_custom_call.1} parent=5 // pred_check
        %p2137 = pneg %p2136
      $region74: #{tpu_custom_call.1} parent=5 // pred_check_branch
        %2139 = sbr.rel (%p2137) target = $region76
      $region75: #{tpu_custom_call.1} parent=5 // pred_region
        %s2140 = ssub.s32 %s25, 2
        // Predicated region
        $region77: #{tpu_custom_call.1} parent=75 // pred_check
          %p2141 = pneg %p190
        $region78: #{tpu_custom_call.1} parent=75 // pred_check_branch
          %2143 = sbr.rel (%p2141) target = $region80
        $region79: #{tpu_custom_call.1} parent=75 // pred_region
          %s2144 = sand.u32 %s175, 1
          %s2145 = scalar_lea.sflag [#allocation4], %s2144
          %s2146 = sand.u32 %s175, 1
          %s2147 = smul.addr %s2146, 128
          %s2148 = scalar_lea.vmem [#allocation11], %s2147
          %2149 = dma.done %s2145, 2048
        $region80: #{tpu_custom_call.1} parent=75 // pred_fallthru
          _
        // Predicated region
        $region81: #{tpu_custom_call.1} parent=75 // pred_check
          %p2150 = pneg %p218
        $region82: #{tpu_custom_call.1} parent=75 // pred_check_branch
          %2152 = sbr.rel (%p2150) target = $region84
        $region83: #{tpu_custom_call.1} parent=75 // pred_region
          %s2153 = sand.u32 %s31, 1
          %s2154 = scalar_lea.sflag [#allocation13], %s2153
          %s2155 = sand.u32 %s203, 1
          %s2156 = smul.addr %s2155, 128
          %s2157 = scalar_lea.vmem [#allocation12], %s2156
          %2158 = dma.done %s2154, 2048
        $region84: #{tpu_custom_call.1} parent=75 // pred_fallthru
          _
        // Predicated region
        $region85: #{tpu_custom_call.1} parent=75 // pred_check
          %p2159 = pneg %p246
        $region86: #{tpu_custom_call.1} parent=75 // pred_check_branch
          %2161 = sbr.rel (%p2159) target = $region88
        $region87: #{tpu_custom_call.1} parent=75 // pred_region
          %s2162 = sand.u32 %s31, 1
          %s2163 = scalar_lea.sflag [#allocation13], %s2162
          %s2164 = sand.u32 %s231, 1
          %s2165 = smul.addr %s2164, 128
          %s2166 = scalar_lea.vmem [#allocation14], %s2165
          %2167 = dma.done %s2163, 2048
        $region88: #{tpu_custom_call.1} parent=75 // pred_fallthru
          _
      $region76: #{tpu_custom_call.1} parent=5 // pred_fallthru
        _
    $region6: #{tpu_custom_call.1} parent=1 // loop_footer
      %s29 = sadd.s32 1, %s25
    $region7: #{tpu_custom_call.1} parent=1 // loop_footer_branch
      %24 = sbr.rel target = $region3
    $region8: #{tpu_custom_call.1} parent=1 // loop_exit
      _
    %2168 = vsyncpa [#allocation3], 1
    %s2169 = scalar_lea.sflag [#allocation3], 1
    %2170 = vsyncpa %s2169, 1
    %2171 = vsyncpa [#allocation6], 1
    %2172 = vsyncpa [#allocation9], 1
    %2173 = vsyncpa [#allocation4], 1
    %s2174 = scalar_lea.sflag [#allocation4], 1
    %2175 = vsyncpa %s2174, 1
    %2176 = vsyncpa [#allocation13], 1
    %s2177 = scalar_lea.sflag [#allocation13], 1
    %2178 = vsyncpa %s2177, 1

</llo_original>
